<compile_context>
chip_gen: v7x
topology: tpu7x:2x2x1
jax: 0.10.0
libtpu: 0.0.40
codegen_flags: <defaults>
</compile_context>

<pallas_src>
import math

import jax
import jax.numpy as jnp
from jax.experimental import pallas as pl
from jax.experimental.pallas import tpu as pltpu


# --------------------------------------------------------------------------- #
# Narrow probe: does this JAX build accept pipeline_mode=pl.Buffered(1)?
# (Construction-only probe — it cannot mask kernel compile/runtime errors.)
# --------------------------------------------------------------------------- #
_SINGLE_BUFFER_MODE = None
if hasattr(pl, "Buffered"):
    try:
        pl.BlockSpec((8, 128), lambda i: (0, 0), pipeline_mode=pl.Buffered(1))
        _SINGLE_BUFFER_MODE = pl.Buffered(1)
    except (TypeError, ValueError):
        _SINGLE_BUFFER_MODE = None


# --------------------------------------------------------------------------- #
# Kernel
# --------------------------------------------------------------------------- #
def _mha_kernel(num_heads, head_dim, batch_tile, seq, mxu_dtype):
    E = num_heads * head_dim
    M = batch_tile * seq

    def kernel(x_ref, wq_ref, wk_ref, wv_ref, wo_ref, b_ref, o_ref):
        # x block: (Bt, S, E) -> merge batch rows so every matmul sees M = Bt*S.
        x = x_ref[...].reshape(M, E).astype(mxu_dtype)

        bq = b_ref[0:1, :]
        bk = b_ref[1:2, :]
        bv = b_ref[2:3, :]
        bo = b_ref[3:4, :]

        # Fused projections (outer Linear + in_proj folded host-side; the
        # 1/sqrt(Dh) attention scale is already folded into wq/bq):
        # 3 matmuls with K = N = E.
        q = jnp.dot(x, wq_ref[...], preferred_element_type=jnp.float32) + bq
        k = jnp.dot(x, wk_ref[...], preferred_element_type=jnp.float32) + bk
        v = jnp.dot(x, wv_ref[...], preferred_element_type=jnp.float32) + bv

        # Split heads once per tensor: H static lane slices + one leading-axis
        # stack -> (H, M, Dh), then a pure leading-dims reshape to
        # (H*Bt, S, Dh).  No per-batch Python loop, no per-(batch,head) gather.
        def to_heads(t):
            th = jnp.stack(
                [t[:, h * head_dim:(h + 1) * head_dim]
                 for h in range(num_heads)], axis=0)        # (H, Bt*S, Dh)
            return th.reshape(num_heads * batch_tile, seq, head_dim)

        qh = to_heads(q).astype(mxu_dtype)
        kh = to_heads(k).astype(mxu_dtype)
        vh = to_heads(v).astype(mxu_dtype)

        # Batched attention over all (batch, head) pairs of this tile.
        s = jnp.einsum("nqd,nkd->nqk", qh, kh,
                       preferred_element_type=jnp.float32)   # (n, S, S) f32
        s = s - jnp.max(s, axis=-1, keepdims=True)
        p = jnp.exp(s)                                       # unnormalized
        inv_denom = pl.reciprocal(jnp.sum(p, axis=-1, keepdims=True),
                                  approx=True)               # (n, S, 1)
        o = jnp.einsum("nqk,nkd->nqd", p.astype(mxu_dtype), vh,
                       preferred_element_type=jnp.float32)   # (n, S, Dh)
        # Normalize AFTER the PV matmul: elementwise work is n*S*Dh, not n*S*S.
        o = o * inv_denom

        # Merge heads back (the inherent MHA concat) and run out_proj as ONE
        # matmul with full K = E MXU occupancy.
        o = o.reshape(num_heads, M, head_dim)
        o = jnp.concatenate([o[h] for h in range(num_heads)], axis=-1)  # (M, E)
        out = jnp.dot(o.astype(mxu_dtype), wo_ref[...],
                      preferred_element_type=jnp.float32) + bo
        o_ref[...] = out.reshape(batch_tile, seq, E).astype(o_ref.dtype)

        # TODO(synk): for long sequences, replace the (n,S,S) score slab with a
        # flash-style online softmax over KV tiles (adds a KV grid axis, bounds
        # VMEM to O(TQ*TK)); and pad E to a multiple of 128 for lane-dense
        # (unmasked) output stores when E is not already 128-aligned.

    return kernel


# --------------------------------------------------------------------------- #
# Host-side parameter preparation (exact algebraic fusion)
# --------------------------------------------------------------------------- #
def fuse_params(params, num_heads, weights_dtype=jnp.float32):
    """(x @ Wq + bq) @ Wiq + biq  ==  x @ (Wq @ Wiq) + (bq @ Wiq + biq).

    Fuses the chained affine layers on the host (once), folds the 1/sqrt(Dh)
    attention scale into the fused q weights/bias, keeps out_proj as a single
    (E, E) matrix, and packs the four biases into one (4, E) f32 slab.
    Set weights_dtype=jnp.bfloat16 for ~2x MXU throughput / half the weight
    VMEM footprint (re-validate tolerances before adopting)."""
    Dh = params["wq"].shape[0] // num_heads
    scale = 1.0 / math.sqrt(Dh)
    hi = jax.lax.Precision.HIGHEST

    def fuse(w_outer, b_outer, w_inner, b_inner):
        w = jnp.dot(w_outer, w_inner, precision=hi)
        b = jnp.dot(b_outer, w_inner, precision=hi) + b_inner
        return w, b

    wq, bq = fuse(params["wq"], params["bq"], params["wiq"], params["biq"])
    wk, bk = fuse(params["wk"], params["bk"], params["wik"], params["bik"])
    wv, bv = fuse(params["wv"], params["bv"], params["wiv"], params["biv"])
    wq = wq * scale
    bq = bq * scale
    return {
        "wq": wq.astype(weights_dtype),
        "wk": wk.astype(weights_dtype),
        "wv": wv.astype(weights_dtype),
        "wo": params["wo"].astype(weights_dtype),                       # (E, E)
        "bias": jnp.concatenate([bq, bk, bv, params["bo"]], 0).astype(jnp.float32),
    }


# --------------------------------------------------------------------------- #
# Tiling / VMEM budgeting helpers
# --------------------------------------------------------------------------- #
def _vmem_limit_bytes():
    """Per-generation scoped-VMEM budget (v7x has 64 MiB, v5e/v6e 128 MiB)."""
    try:
        cap = pltpu.get_tpu_info().vmem_capacity_bytes
    except Exception:       # hardware query only; never masks kernel errors
        cap = None
    if not cap:
        cap = 64 * 1024 * 1024          # conservative (v7x-sized) fallback
    return max(32 * 1024 * 1024, min(int(cap * 3) // 4, 96 * 1024 * 1024))


def _estimate_vmem_bytes(bt, seq, emb, heads, w_bytes):
    """Rough per-grid-step working set (weights + double-buffered IO + temps)."""
    m = bt * seq
    dh = emb // heads
    weights = 4 * emb * emb * w_bytes + 4 * emb * 4
    io = 2 * 2 * bt * seq * emb * 4            # x + out blocks, double-buffered
    proj = 3 * m * emb * 4                     # q, k, v
    stacks = 3 * heads * m * dh * 4            # qh, kh, vh
    scores = 2 * bt * heads * seq * seq * 4    # s, p
    outs = 2 * m * emb * 4                     # o head-stack + merged
    return weights + io + proj + stacks + scores + outs


def _pick_batch_tile(batch, seq, target_rows=512, max_tile=8):
    """Batch elements per grid step: make the projection M-dim (tile*seq) big
    enough to feed the MXU, but always leave >= 2 grid steps so both v7x
    TensorCores get 'parallel' work."""
    if seq % 8 != 0:        # keep the (Bt,S,E)->(Bt*S,E) merge layout-trivial
        return 1
    cands = [c for c in range(1, min(batch, max_tile) + 1) if batch % c == 0]
    bt = cands[0]
    for c in cands:
        bt = c
        if c * seq >= target_rows:
            break
    while bt > 1 and batch // bt < 2:
        bt = max(c for c in cands if c < bt)
    return bt


def _const_spec(shape, single_buffer):
    """Grid-invariant operand: single-buffer it when this build supports
    pipeline_mode (double-buffering constant blocks is pure VMEM waste)."""
    nd = len(shape)
    index_map = lambda i: (0,) * nd
    if single_buffer and _SINGLE_BUFFER_MODE is not None:
        return pl.BlockSpec(shape, index_map, pipeline_mode=_SINGLE_BUFFER_MODE)
    return pl.BlockSpec(shape, index_map)


# --------------------------------------------------------------------------- #
# Wrapper
# --------------------------------------------------------------------------- #
def multihead_attention_pallas(x, fused, num_heads, *, single_buffer_weights=True):
    """x: (B, S, E) float32.  fused: output of fuse_params()."""
    B, S, E = x.shape
    Dh = E // num_heads
    assert Dh * num_heads == E

    vmem_limit = _vmem_limit_bytes()
    w_bytes = jnp.dtype(fused["wq"].dtype).itemsize

    Bt = _pick_batch_tile(B, S)
    # Shrink the batch tile if the per-step working set would blow the budget
    # (matters on v7x's 64 MiB VMEM for large S / E).
    while Bt > 1 and _estimate_vmem_bytes(Bt, S, E, num_heads, w_bytes) > int(0.8 * vmem_limit):
        Bt = max(c for c in range(1, Bt) if B % c == 0)
    grid = (B // Bt,)

    kernel = _mha_kernel(num_heads, Dh, Bt, S, fused["wq"].dtype)

    w_spec = _const_spec((E, E), single_buffer_weights)
    b_spec = _const_spec((4, E), single_buffer_weights)

    return pl.pallas_call(
        kernel,
        out_shape=jax.ShapeDtypeStruct((B, S, E), x.dtype),
        grid_spec=pltpu.PrefetchScalarGridSpec(
            num_scalar_prefetch=0,
            grid=grid,
            in_specs=[
                pl.BlockSpec((Bt, S, E), lambda i: (i, 0, 0)),   # x
                w_spec, w_spec, w_spec,                          # wq / wk / wv
                w_spec,                                          # wo (E, E)
                b_spec,                                          # packed biases
            ],
            out_specs=pl.BlockSpec((Bt, S, E), lambda i: (i, 0, 0)),
        ),
        compiler_params=pltpu.CompilerParams(
            dimension_semantics=("parallel",),
            vmem_limit_bytes=vmem_limit,
        ),
    )(x, fused["wq"], fused["wk"], fused["wv"], fused["wo"], fused["bias"])


# --------------------------------------------------------------------------- #
# Parameters & pure-JAX reference
# --------------------------------------------------------------------------- #
def init_params(key, embedding_dim):
    """Deterministic synthetic parameters (PyTorch-style uniform init).
    Weights stored pre-transposed (in, out) so forward computes x @ W;
    biases stored as (1, E)."""
    E = embedding_dim
    bound = 1.0 / math.sqrt(E)
    keys = jax.random.split(key, 16)

    def w(k):
        return jax.random.uniform(k, (E, E), jnp.float32, -bound, bound)

    def b(k):
        return jax.random.uniform(k, (1, E), jnp.float32, -bound, bound)

    return {
        # outer q/k/v Linear layers
        "wq": w(keys[0]), "bq": b(keys[1]),
        "wk": w(keys[2]), "bk": b(keys[3]),
        "wv": w(keys[4]), "bv": b(keys[5]),
        # nn.MultiheadAttention in_proj (split q/k/v)
        "wiq": w(keys[6]), "biq": b(keys[7]),
        "wik": w(keys[8]), "bik": b(keys[9]),
        "wiv": w(keys[10]), "biv": b(keys[11]),
        # out_proj
        "wo": w(keys[12]), "bo": b(keys[13]),
    }


def reference_jax(x, params, num_heads):
    """Pure-JAX reference reproducing the PyTorch forward semantics."""
    B, S, E = x.shape
    Dh = E // num_heads
    q1 = x @ params["wq"] + params["bq"]
    k1 = x @ params["wk"] + params["bk"]
    v1 = x @ params["wv"] + params["bv"]
    q2 = q1 @ params["wiq"] + params["biq"]
    k2 = k1 @ params["wik"] + params["bik"]
    v2 = v1 @ params["wiv"] + params["biv"]
    q = q2.reshape(B, S, num_heads, Dh).transpose(0, 2, 1, 3)
    k = k2.reshape(B, S, num_heads, Dh).transpose(0, 2, 1, 3)
    v = v2.reshape(B, S, num_heads, Dh).transpose(0, 2, 1, 3)
    s = jnp.einsum("bhqd,bhkd->bhqk", q, k) / math.sqrt(Dh)
    p = jax.nn.softmax(s, axis=-1)
    o = jnp.einsum("bhqk,bhkd->bhqd", p, v)
    o = o.transpose(0, 2, 1, 3).reshape(B, S, E)
    return o @ params["wo"] + params["bo"]


if __name__ == "__main__":
    B, S, E, H = 2, 8, 32, 4

    key = jax.random.PRNGKey(0)
    kx, kp = jax.random.split(key)
    x = jax.random.normal(kx, (B, S, E), jnp.float32)
    params = init_params(kp, E)

    # Host-side fusion, done once.  weights_dtype=jnp.bfloat16 enables the
    # 2x-MXU-throughput path (kept f32 here to preserve the tight check).
    fused = fuse_params(params, H, weights_dtype=jnp.float32)
    out = multihead_attention_pallas(x, fused, H)
    out = jax.block_until_ready(out)

    ref = reference_jax(x, params, H)
    assert out.shape == (B, S, E)
    # Tolerance 2e-3 because the softmax denominator uses the EUP approximate
    # reciprocal (pl.reciprocal(..., approx=True)); use approx=False for 1e-4.
    assert jnp.allclose(out, ref, atol=2e-3, rtol=2e-3), "mismatch vs reference"

    print("KERNEL_OK")
</pallas_src>

<mosaic_0001>
module attributes {stable_mosaic.version = 11 : i64} {
  func.func @kernel(%arg0: i32, %arg1: memref<1x8x32xf32, #tpu.memory_space<vmem>>, %arg2: memref<32x32xf32, #tpu.memory_space<vmem>>, %arg3: memref<32x32xf32, #tpu.memory_space<vmem>>, %arg4: memref<32x32xf32, #tpu.memory_space<vmem>>, %arg5: memref<32x32xf32, #tpu.memory_space<vmem>>, %arg6: memref<4x32xf32, #tpu.memory_space<vmem>>, %arg7: memref<1x8x32xf32, #tpu.memory_space<vmem>>) attributes {dimension_semantics = [#tpu.dimension_semantics<parallel>], iteration_bounds = array<i64: 2>, scalar_prefetch = 0 : i64, scratch_operands = 0 : i64, tpu.core_type = #tpu.core_type<tc>, window_params = [{transform_indices = @transform_0, window_bounds = array<i64: 1, 8, 32>}, {pipeline_mode = #tpu.pipeline_mode<synchronous>, transform_indices = @transform_1, window_bounds = array<i64: 32, 32>}, {pipeline_mode = #tpu.pipeline_mode<synchronous>, transform_indices = @transform_2, window_bounds = array<i64: 32, 32>}, {pipeline_mode = #tpu.pipeline_mode<synchronous>, transform_indices = @transform_3, window_bounds = array<i64: 32, 32>}, {pipeline_mode = #tpu.pipeline_mode<synchronous>, transform_indices = @transform_4, window_bounds = array<i64: 32, 32>}, {pipeline_mode = #tpu.pipeline_mode<synchronous>, transform_indices = @transform_5, window_bounds = array<i64: 4, 32>}, {transform_indices = @transform_6, window_bounds = array<i64: 1, 8, 32>}]} {
    %c0 = arith.constant 0 : index
    %c0_0 = arith.constant 0 : index
    %c0_1 = arith.constant 0 : index
    %0 = vector.load %arg1[%c0, %c0_0, %c0_1] : memref<1x8x32xf32, #tpu.memory_space<vmem>>, vector<1x8x32xf32>
    %1 = vector.shape_cast %0 : vector<1x8x32xf32> to vector<8x32xf32>
    %c0_2 = arith.constant 0 : index
    %c0_3 = arith.constant 0 : index
    %2 = vector.load %arg6[%c0_2, %c0_3] : memref<4x32xf32, #tpu.memory_space<vmem>>, vector<1x32xf32>
    %c1 = arith.constant 1 : index
    %c0_4 = arith.constant 0 : index
    %3 = vector.load %arg6[%c1, %c0_4] : memref<4x32xf32, #tpu.memory_space<vmem>>, vector<1x32xf32>
    %c2 = arith.constant 2 : index
    %c0_5 = arith.constant 0 : index
    %4 = vector.load %arg6[%c2, %c0_5] : memref<4x32xf32, #tpu.memory_space<vmem>>, vector<1x32xf32>
    %c3 = arith.constant 3 : index
    %c0_6 = arith.constant 0 : index
    %5 = vector.load %arg6[%c3, %c0_6] : memref<4x32xf32, #tpu.memory_space<vmem>>, vector<1x32xf32>
    %c0_7 = arith.constant 0 : index
    %c0_8 = arith.constant 0 : index
    %6 = vector.load %arg2[%c0_7, %c0_8] : memref<32x32xf32, #tpu.memory_space<vmem>>, vector<32x32xf32>
    %cst = arith.constant dense<0.000000e+00> : vector<8x32xf32>
    %7 = tpu.matmul %1, %6, %cst {dimension_numbers = #tpu.dot_dimension_numbers<[1], [0], [0], [1], [0, 0, 1, 1], [], []>} : vector<8x32xf32>, vector<32x32xf32>, vector<8x32xf32> -> vector<8x32xf32>
    %8 = vector.broadcast %2 : vector<1x32xf32> to vector<8x32xf32>
    %9 = arith.addf %7, %8 : vector<8x32xf32>
    %c0_9 = arith.constant 0 : index
    %c0_10 = arith.constant 0 : index
    %10 = vector.load %arg3[%c0_9, %c0_10] : memref<32x32xf32, #tpu.memory_space<vmem>>, vector<32x32xf32>
    %cst_11 = arith.constant dense<0.000000e+00> : vector<8x32xf32>
    %11 = tpu.matmul %1, %10, %cst_11 {dimension_numbers = #tpu.dot_dimension_numbers<[1], [0], [0], [1], [0, 0, 1, 1], [], []>} : vector<8x32xf32>, vector<32x32xf32>, vector<8x32xf32> -> vector<8x32xf32>
    %12 = vector.broadcast %3 : vector<1x32xf32> to vector<8x32xf32>
    %13 = arith.addf %11, %12 : vector<8x32xf32>
    %c0_12 = arith.constant 0 : index
    %c0_13 = arith.constant 0 : index
    %14 = vector.load %arg4[%c0_12, %c0_13] : memref<32x32xf32, #tpu.memory_space<vmem>>, vector<32x32xf32>
    %cst_14 = arith.constant dense<0.000000e+00> : vector<8x32xf32>
    %15 = tpu.matmul %1, %14, %cst_14 {dimension_numbers = #tpu.dot_dimension_numbers<[1], [0], [0], [1], [0, 0, 1, 1], [], []>} : vector<8x32xf32>, vector<32x32xf32>, vector<8x32xf32> -> vector<8x32xf32>
    %16 = vector.broadcast %4 : vector<1x32xf32> to vector<8x32xf32>
    %17 = arith.addf %15, %16 : vector<8x32xf32>
    %18 = vector.extract_strided_slice %9 {offsets = [0, 0], sizes = [8, 8], strides = [1, 1]} : vector<8x32xf32> to vector<8x8xf32>
    %19 = vector.extract_strided_slice %9 {offsets = [0, 8], sizes = [8, 8], strides = [1, 1]} : vector<8x32xf32> to vector<8x8xf32>
    %20 = vector.extract_strided_slice %9 {offsets = [0, 16], sizes = [8, 8], strides = [1, 1]} : vector<8x32xf32> to vector<8x8xf32>
    %21 = vector.extract_strided_slice %9 {offsets = [0, 24], sizes = [8, 8], strides = [1, 1]} : vector<8x32xf32> to vector<8x8xf32>
    %22 = vector.shape_cast %18 : vector<8x8xf32> to vector<1x8x8xf32>
    %23 = vector.shape_cast %19 : vector<8x8xf32> to vector<1x8x8xf32>
    %24 = vector.shape_cast %20 : vector<8x8xf32> to vector<1x8x8xf32>
    %25 = vector.shape_cast %21 : vector<8x8xf32> to vector<1x8x8xf32>
    %26 = tpu.concatenate %22, %23, %24, %25 in 0 : vector<1x8x8xf32>, vector<1x8x8xf32>, vector<1x8x8xf32>, vector<1x8x8xf32> -> vector<4x8x8xf32>
    %27 = vector.extract_strided_slice %13 {offsets = [0, 0], sizes = [8, 8], strides = [1, 1]} : vector<8x32xf32> to vector<8x8xf32>
    %28 = vector.extract_strided_slice %13 {offsets = [0, 8], sizes = [8, 8], strides = [1, 1]} : vector<8x32xf32> to vector<8x8xf32>
    %29 = vector.extract_strided_slice %13 {offsets = [0, 16], sizes = [8, 8], strides = [1, 1]} : vector<8x32xf32> to vector<8x8xf32>
    %30 = vector.extract_strided_slice %13 {offsets = [0, 24], sizes = [8, 8], strides = [1, 1]} : vector<8x32xf32> to vector<8x8xf32>
    %31 = vector.shape_cast %27 : vector<8x8xf32> to vector<1x8x8xf32>
    %32 = vector.shape_cast %28 : vector<8x8xf32> to vector<1x8x8xf32>
    %33 = vector.shape_cast %29 : vector<8x8xf32> to vector<1x8x8xf32>
    %34 = vector.shape_cast %30 : vector<8x8xf32> to vector<1x8x8xf32>
    %35 = tpu.concatenate %31, %32, %33, %34 in 0 : vector<1x8x8xf32>, vector<1x8x8xf32>, vector<1x8x8xf32>, vector<1x8x8xf32> -> vector<4x8x8xf32>
    %36 = vector.extract_strided_slice %17 {offsets = [0, 0], sizes = [8, 8], strides = [1, 1]} : vector<8x32xf32> to vector<8x8xf32>
    %37 = vector.extract_strided_slice %17 {offsets = [0, 8], sizes = [8, 8], strides = [1, 1]} : vector<8x32xf32> to vector<8x8xf32>
    %38 = vector.extract_strided_slice %17 {offsets = [0, 16], sizes = [8, 8], strides = [1, 1]} : vector<8x32xf32> to vector<8x8xf32>
    %39 = vector.extract_strided_slice %17 {offsets = [0, 24], sizes = [8, 8], strides = [1, 1]} : vector<8x32xf32> to vector<8x8xf32>
    %40 = vector.shape_cast %36 : vector<8x8xf32> to vector<1x8x8xf32>
    %41 = vector.shape_cast %37 : vector<8x8xf32> to vector<1x8x8xf32>
    %42 = vector.shape_cast %38 : vector<8x8xf32> to vector<1x8x8xf32>
    %43 = vector.shape_cast %39 : vector<8x8xf32> to vector<1x8x8xf32>
    %44 = tpu.concatenate %40, %41, %42, %43 in 0 : vector<1x8x8xf32>, vector<1x8x8xf32>, vector<1x8x8xf32>, vector<1x8x8xf32> -> vector<4x8x8xf32>
    "tpu.trace_start"() <{level = 10 : i32, message = "nqd,nkd->nqk"}> : () -> ()
    %cst_15 = arith.constant dense<0.000000e+00> : vector<4x8x8xf32>
    %45 = tpu.matmul %26, %35, %cst_15 {dimension_numbers = #tpu.dot_dimension_numbers<[2], [2], [1], [1], [0, 0, 0, 1, 1, 1], [0], [0]>} : vector<4x8x8xf32>, vector<4x8x8xf32>, vector<4x8x8xf32> -> vector<4x8x8xf32>
    "tpu.trace_stop"() : () -> ()
    %cst_16 = arith.constant dense<0xFF800000> : vector<4x8xf32>
    %46 = vector.multi_reduction <maximumf>, %45, %cst_16 [2] : vector<4x8x8xf32> to vector<4x8xf32>
    %47 = vector.shape_cast %46 : vector<4x8xf32> to vector<4x8x1xf32>
    %48 = vector.broadcast %47 : vector<4x8x1xf32> to vector<4x8x8xf32>
    %49 = arith.subf %45, %48 : vector<4x8x8xf32>
    %50 = math.exp %49 : vector<4x8x8xf32>
    %cst_17 = arith.constant dense<0.000000e+00> : vector<4x8xf32>
    %51 = vector.multi_reduction <add>, %50, %cst_17 [2] : vector<4x8x8xf32> to vector<4x8xf32>
    %52 = vector.shape_cast %51 : vector<4x8xf32> to vector<4x8x1xf32>
    %53 = tpu.reciprocal %52 {approx = true} : vector<4x8x1xf32> -> vector<4x8x1xf32>
    "tpu.trace_start"() <{level = 10 : i32, message = "nqk,nkd->nqd"}> : () -> ()
    %cst_18 = arith.constant dense<0.000000e+00> : vector<4x8x8xf32>
    %54 = tpu.matmul %50, %44, %cst_18 {dimension_numbers = #tpu.dot_dimension_numbers<[2], [1], [1], [2], [0, 0, 0, 1, 1, 2], [0], [0]>} : vector<4x8x8xf32>, vector<4x8x8xf32>, vector<4x8x8xf32> -> vector<4x8x8xf32>
    "tpu.trace_stop"() : () -> ()
    %55 = vector.broadcast %53 : vector<4x8x1xf32> to vector<4x8x8xf32>
    %56 = arith.mulf %54, %55 : vector<4x8x8xf32>
    %57 = vector.extract_strided_slice %56 {offsets = [0, 0, 0], sizes = [1, 8, 8], strides = [1, 1, 1]} : vector<4x8x8xf32> to vector<1x8x8xf32>
    %58 = vector.shape_cast %57 : vector<1x8x8xf32> to vector<8x8xf32>
    %59 = vector.extract_strided_slice %56 {offsets = [1, 0, 0], sizes = [1, 8, 8], strides = [1, 1, 1]} : vector<4x8x8xf32> to vector<1x8x8xf32>
    %60 = vector.shape_cast %59 : vector<1x8x8xf32> to vector<8x8xf32>
    %61 = vector.extract_strided_slice %56 {offsets = [2, 0, 0], sizes = [1, 8, 8], strides = [1, 1, 1]} : vector<4x8x8xf32> to vector<1x8x8xf32>
    %62 = vector.shape_cast %61 : vector<1x8x8xf32> to vector<8x8xf32>
    %63 = vector.extract_strided_slice %56 {offsets = [3, 0, 0], sizes = [1, 8, 8], strides = [1, 1, 1]} : vector<4x8x8xf32> to vector<1x8x8xf32>
    %64 = vector.shape_cast %63 : vector<1x8x8xf32> to vector<8x8xf32>
    %65 = tpu.concatenate %58, %60, %62, %64 in 1 : vector<8x8xf32>, vector<8x8xf32>, vector<8x8xf32>, vector<8x8xf32> -> vector<8x32xf32>
    %c0_19 = arith.constant 0 : index
    %c0_20 = arith.constant 0 : index
    %66 = vector.load %arg5[%c0_19, %c0_20] : memref<32x32xf32, #tpu.memory_space<vmem>>, vector<32x32xf32>
    %cst_21 = arith.constant dense<0.000000e+00> : vector<8x32xf32>
    %67 = tpu.matmul %65, %66, %cst_21 {dimension_numbers = #tpu.dot_dimension_numbers<[1], [0], [0], [1], [0, 0, 1, 1], [], []>} : vector<8x32xf32>, vector<32x32xf32>, vector<8x32xf32> -> vector<8x32xf32>
    %68 = vector.broadcast %5 : vector<1x32xf32> to vector<8x32xf32>
    %69 = arith.addf %67, %68 : vector<8x32xf32>
    %70 = vector.shape_cast %69 : vector<8x32xf32> to vector<1x8x32xf32>
    %c0_22 = arith.constant 0 : index
    %c0_23 = arith.constant 0 : index
    %c0_24 = arith.constant 0 : index
    %71 = vector.load %arg7[%c0_22, %c0_23, %c0_24] : memref<1x8x32xf32, #tpu.memory_space<vmem>>, vector<1x8x32xf32>
    tpu.vector_store %arg7[%c0_22, %c0_23, %c0_24], %70 {strides = array<i32>} : memref<1x8x32xf32, #tpu.memory_space<vmem>>, vector<1x8x32xf32>,
    return
  }
  func.func @transform_0(%arg0: i32) -> (i32, i32, i32) {
    %c0_i32 = arith.constant 0 : i32
    %c0_i32_0 = arith.constant 0 : i32
    %c0_i32_1 = arith.constant 0 : i32
    return %arg0, %c0_i32, %c0_i32_0 : i32, i32, i32
  }
  func.func @transform_1(%arg0: i32) -> (i32, i32) {
    %c0_i32 = arith.constant 0 : i32
    %c0_i32_0 = arith.constant 0 : i32
    %c0_i32_1 = arith.constant 0 : i32
    return %c0_i32, %c0_i32_0 : i32, i32
  }
  func.func @transform_2(%arg0: i32) -> (i32, i32) {
    %c0_i32 = arith.constant 0 : i32
    %c0_i32_0 = arith.constant 0 : i32
    %c0_i32_1 = arith.constant 0 : i32
    return %c0_i32, %c0_i32_0 : i32, i32
  }
  func.func @transform_3(%arg0: i32) -> (i32, i32) {
    %c0_i32 = arith.constant 0 : i32
    %c0_i32_0 = arith.constant 0 : i32
    %c0_i32_1 = arith.constant 0 : i32
    return %c0_i32, %c0_i32_0 : i32, i32
  }
  func.func @transform_4(%arg0: i32) -> (i32, i32) {
    %c0_i32 = arith.constant 0 : i32
    %c0_i32_0 = arith.constant 0 : i32
    %c0_i32_1 = arith.constant 0 : i32
    return %c0_i32, %c0_i32_0 : i32, i32
  }
  func.func @transform_5(%arg0: i32) -> (i32, i32) {
    %c0_i32 = arith.constant 0 : i32
    %c0_i32_0 = arith.constant 0 : i32
    %c0_i32_1 = arith.constant 0 : i32
    return %c0_i32, %c0_i32_0 : i32, i32
  }
  func.func @transform_6(%arg0: i32) -> (i32, i32, i32) {
    %c0_i32 = arith.constant 0 : i32
    %c0_i32_0 = arith.constant 0 : i32
    %c0_i32_1 = arith.constant 0 : i32
    return %arg0, %c0_i32, %c0_i32_0 : i32, i32, i32
  }
}

</mosaic_0001>

<llo_original>
// kernel: tpu_custom_call.1
$region0: #{tpu_custom_call.1}
  #allocation0 [shape = 'u32[]', space=smem, size = 0x4, offset = 0x4, fixed_abs, tag = 'smem constant byte address 0x4 - core index']
  #allocation1 [shape = 'u32[144,128]{1,0:T(1,128)}', space=vmem, size = 0x12000, scoped, tag = 'internal scratch']
  %s0 = inlined_call_operand.hbm [shape: f32[2,8,32], index: 0, kind: input, shape index: {}]
  %s1 = inlined_call_operand.hbm [shape: f32[32,32], index: 1, kind: input, shape index: {}]
  %s2 = inlined_call_operand.hbm [shape: f32[32,32], index: 2, kind: input, shape index: {}]
  %s3 = inlined_call_operand.hbm [shape: f32[32,32], index: 3, kind: input, shape index: {}]
  %s4 = inlined_call_operand.hbm [shape: f32[32,32], index: 4, kind: input, shape index: {}]
  %s5 = inlined_call_operand.vmem [shape: f32[4,32], index: 5, kind: input, shape index: {}]
  %s6 = inlined_call_operand.hbm [shape: f32[2,8,32], index: 6, kind: output, shape index: {}]
  %s7 = sld [smem:[#allocation0]]
  $region77: #{tpu_custom_call.1} parent=0
    _
  %s9 = ssub.s32 1, %s7
  %s10 = scalar_select 0, %s9, %s7
  $region1: #{tpu_custom_call.1} parent=0
    #allocation2 [shape = 'u8[8192]{0}', space=vmem, size = 0x2000, scoped, tag = 'input window, operand 0']
    #allocation3 [shape = 's32[2]{0}', space=sflag, size = 0x8, scoped, tag = 'scoped memory for tpu_custom_call.1']
    #allocation4 [shape = 's32[2]{0}', space=sflag, size = 0x8, scoped, tag = 'scoped memory for tpu_custom_call.1']
    #allocation5 [shape = 'u8[16384]{0}', space=vmem, size = 0x4000, scoped, tag = 'input window, operand 1, single buffered']
    #allocation6 [shape = 's32[1]{0}', space=sflag, size = 0x4, scoped, tag = 'scoped memory for tpu_custom_call.1']
    #allocation7 [shape = 'u8[16384]{0}', space=vmem, size = 0x4000, scoped, tag = 'input window, operand 2, single buffered']
    #allocation8 [shape = 'u8[16384]{0}', space=vmem, size = 0x4000, scoped, tag = 'input window, operand 3, single buffered']
    #allocation9 [shape = 's32[1]{0}', space=sflag, size = 0x4, scoped, tag = 'scoped memory for tpu_custom_call.1']
    #allocation10 [shape = 'u8[16384]{0}', space=vmem, size = 0x4000, scoped, tag = 'input window, operand 4, single buffered']
    #allocation11 [shape = 'u8[8192]{0}', space=vmem, size = 0x2000, scoped, tag = 'output window, operand 0']
    %11 = vsyncpa [#allocation3], 0
    %s12 = scalar_lea.sflag [#allocation3], 1
    %13 = vsyncpa %s12, 0
    %14 = vsyncpa [#allocation6], 0
    %15 = vsyncpa [#allocation9], 0
    %16 = vsyncpa [#allocation4], 0
    %s17 = scalar_lea.sflag [#allocation4], 1
    %18 = vsyncpa %s17, 0
    loop: start=0, step=1, limit=4
    $region2: #{tpu_custom_call.1} parent=1 // loop_pre_header
      _
    $region3: #{tpu_custom_call.1} parent=1 // loop_header
      %s20 = sphi 0, %s24
      %p21 = scmp.ge.s32.totalorder %s20, 4
      %s30 = sphi 0, %s32
      %s33 = sphi 0, %s30
      %s34 = sphi 0, %s33
      %s50 = sphi 0, %s34
      %s54 = sphi 0, %s54
      %s56 = sphi 0, %s54
      %s57 = sphi 0, %s56
      %s71 = sphi 0, %s57
      %s75 = sphi 0, %s75
      %s77 = sphi 0, %s75
      %s78 = sphi 0, %s77
      %s92 = sphi 0, %s78
      %s96 = sphi 0, %s96
      %s98 = sphi 0, %s96
      %s99 = sphi 0, %s98
      %s113 = sphi 0, %s99
      %s117 = sphi 0, %s117
      %s119 = sphi 0, %s117
      %s120 = sphi 0, %s119
      %s134 = sphi 0, %s120
      %s138 = sphi 0, %s138
      %s140 = sphi 0, %s138
      %s141 = sphi 0, %s140
      %s155 = sphi 0, %s141
      %s161 = sphi 0, %s163
      %s164 = sphi 0, %s161
      %s165 = sphi 0, %s164
      %s181 = sphi 0, %s165
    $region4: #{tpu_custom_call.1} parent=1 // loop_header_branch
      %23 = sbr.rel (%p21) target = $region8
    $region5: #{tpu_custom_call.1} parent=1 // loop_body
      %s25 = ssub.s32 %s20, 1
      %s26 = ssub.s32 %s20, 2
      %s27 = sadd.s32 %s20, 1
      %s28 = ssub.s32 %s20, %s27
      %p29 = scmp.eq.s32.totalorder %s28, 0
      %s31 = sadd.s32 %s30, 1
      %s32 = scalar_select %p29, %s30, %s31
      %p35 = pneg %p29
      %p36 = scmp.eq.s32.totalorder %s20, 1
      %p37 = por %p35, %p36
      %p38 = scmp.ne.s32.totalorder %s30, %s33
      %p39 = scmp.eq.s32.totalorder %s20, 0
      %p40 = por %p38, %p39
      %p41 = scmp.ne.s32.totalorder %s30, %s33
      %p42 = scmp.eq.s32.totalorder %s25, 1
      %p43 = por %p41, %p42
      %p44 = scmp.ne.s32.totalorder %s33, %s34
      %p45 = scmp.eq.s32.totalorder %s25, 0
      %p46 = por %p44, %p45
      %p47 = scmp.ne.s32.totalorder %s33, %s34
      %p48 = scmp.eq.s32.totalorder %s26, 1
      %p49 = por %p47, %p48
      %p51 = scmp.ne.s32.totalorder %s34, %s50
      %p52 = scmp.eq.s32.totalorder %s26, 0
      %p53 = por %p51, %p52
      %s55 = sadd.s32 %s54, 1
      %p58 = scmp.eq.s32.totalorder %s20, 1
      %p59 = scmp.ne.s32.totalorder %s54, %s56
      %p60 = scmp.eq.s32.totalorder %s20, 0
      %p61 = por %p59, %p60
      %p62 = scmp.ne.s32.totalorder %s54, %s56
      %p63 = scmp.eq.s32.totalorder %s25, 1
      %p64 = por %p62, %p63
      %p65 = scmp.ne.s32.totalorder %s56, %s57
      %p66 = scmp.eq.s32.totalorder %s25, 0
      %p67 = por %p65, %p66
      %p68 = scmp.ne.s32.totalorder %s56, %s57
      %p69 = scmp.eq.s32.totalorder %s26, 1
      %p70 = por %p68, %p69
      %p72 = scmp.ne.s32.totalorder %s57, %s71
      %p73 = scmp.eq.s32.totalorder %s26, 0
      %p74 = por %p72, %p73
      %s76 = sadd.s32 %s75, 1
      %p79 = scmp.eq.s32.totalorder %s20, 1
      %p80 = scmp.ne.s32.totalorder %s75, %s77
      %p81 = scmp.eq.s32.totalorder %s20, 0
      %p82 = por %p80, %p81
      %p83 = scmp.ne.s32.totalorder %s75, %s77
      %p84 = scmp.eq.s32.totalorder %s25, 1
      %p85 = por %p83, %p84
      %p86 = scmp.ne.s32.totalorder %s77, %s78
      %p87 = scmp.eq.s32.totalorder %s25, 0
      %p88 = por %p86, %p87
      %p89 = scmp.ne.s32.totalorder %s77, %s78
      %p90 = scmp.eq.s32.totalorder %s26, 1
      %p91 = por %p89, %p90
      %p93 = scmp.ne.s32.totalorder %s78, %s92
      %p94 = scmp.eq.s32.totalorder %s26, 0
      %p95 = por %p93, %p94
      %s97 = sadd.s32 %s96, 1
      %p100 = scmp.eq.s32.totalorder %s20, 1
      %p101 = scmp.ne.s32.totalorder %s96, %s98
      %p102 = scmp.eq.s32.totalorder %s20, 0
      %p103 = por %p101, %p102
      %p104 = scmp.ne.s32.totalorder %s96, %s98
      %p105 = scmp.eq.s32.totalorder %s25, 1
      %p106 = por %p104, %p105
      %p107 = scmp.ne.s32.totalorder %s98, %s99
      %p108 = scmp.eq.s32.totalorder %s25, 0
      %p109 = por %p107, %p108
      %p110 = scmp.ne.s32.totalorder %s98, %s99
      %p111 = scmp.eq.s32.totalorder %s26, 1
      %p112 = por %p110, %p111
      %p114 = scmp.ne.s32.totalorder %s99, %s113
      %p115 = scmp.eq.s32.totalorder %s26, 0
      %p116 = por %p114, %p115
      %s118 = sadd.s32 %s117, 1
      %p121 = scmp.eq.s32.totalorder %s20, 1
      %p122 = scmp.ne.s32.totalorder %s117, %s119
      %p123 = scmp.eq.s32.totalorder %s20, 0
      %p124 = por %p122, %p123
      %p125 = scmp.ne.s32.totalorder %s117, %s119
      %p126 = scmp.eq.s32.totalorder %s25, 1
      %p127 = por %p125, %p126
      %p128 = scmp.ne.s32.totalorder %s119, %s120
      %p129 = scmp.eq.s32.totalorder %s25, 0
      %p130 = por %p128, %p129
      %p131 = scmp.ne.s32.totalorder %s119, %s120
      %p132 = scmp.eq.s32.totalorder %s26, 1
      %p133 = por %p131, %p132
      %p135 = scmp.ne.s32.totalorder %s120, %s134
      %p136 = scmp.eq.s32.totalorder %s26, 0
      %p137 = por %p135, %p136
      %s139 = sadd.s32 %s138, 1
      %p142 = scmp.eq.s32.totalorder %s20, 1
      %p143 = scmp.ne.s32.totalorder %s138, %s140
      %p144 = scmp.eq.s32.totalorder %s20, 0
      %p145 = por %p143, %p144
      %p146 = scmp.ne.s32.totalorder %s138, %s140
      %p147 = scmp.eq.s32.totalorder %s25, 1
      %p148 = por %p146, %p147
      %p149 = scmp.ne.s32.totalorder %s140, %s141
      %p150 = scmp.eq.s32.totalorder %s25, 0
      %p151 = por %p149, %p150
      %p152 = scmp.ne.s32.totalorder %s140, %s141
      %p153 = scmp.eq.s32.totalorder %s26, 1
      %p154 = por %p152, %p153
      %p156 = scmp.ne.s32.totalorder %s141, %s155
      %p157 = scmp.eq.s32.totalorder %s26, 0
      %p158 = por %p156, %p157
      %s159 = ssub.s32 %s20, %s27
      %p160 = scmp.eq.s32.totalorder %s159, 0
      %s162 = sadd.s32 %s161, 1
      %s163 = scalar_select %p160, %s161, %s162
      %p166 = pneg %p160
      %p167 = scmp.eq.s32.totalorder %s20, 1
      %p168 = por %p166, %p167
      %p169 = scmp.ne.s32.totalorder %s161, %s164
      %p170 = scmp.eq.s32.totalorder %s20, 0
      %p171 = por %p169, %p170
      %p172 = scmp.ne.s32.totalorder %s161, %s164
      %p173 = scmp.eq.s32.totalorder %s25, 1
      %p174 = por %p172, %p173
      %p175 = scmp.ne.s32.totalorder %s164, %s165
      %p176 = scmp.eq.s32.totalorder %s25, 0
      %p177 = por %p175, %p176
      %p178 = scmp.ne.s32.totalorder %s164, %s165
      %p179 = scmp.eq.s32.totalorder %s26, 1
      %p180 = por %p178, %p179
      %p182 = scmp.ne.s32.totalorder %s165, %s181
      %p183 = scmp.eq.s32.totalorder %s26, 0
      %p184 = por %p182, %p183
      %p185 = scmp.le.s32.totalorder 1, %s20
      %p186 = scmp.lt.s32.totalorder %s20, 3
      %p187 = pnand %p185, %p186
      %p188 = pneg %p187
      // Predicated region
      $region9: #{tpu_custom_call.1} parent=5 // pred_check
        _
      $region10: #{tpu_custom_call.1} parent=5 // pred_check_branch
        %190 = sbr.rel (%p187) target = $region12
      $region11: #{tpu_custom_call.1} parent=5 // pred_region
        %s191 = ssub.s32 %s20, 1
        // Predicated region
        $region13: #{tpu_custom_call.1} parent=11 // pred_check
          %p192 = pneg %p67
        $region14: #{tpu_custom_call.1} parent=11 // pred_check_branch
          %194 = sbr.rel (%p192) target = $region16
        $region15: #{tpu_custom_call.1} parent=11 // pred_region
          %s196 = ssub.s32 512, 512
          %197 = vsyncadd [#allocation6], %s196
          %s198 = sshll.u32 [#allocation5], 4
          %s199 = int_to_ptr.vmem [resolvable:$true] %s198
          %204 = dma.hbm_to_vmem [thread:$0]  %s1, 512, %s199, [#allocation6], 128, 128, 8
        $region16: #{tpu_custom_call.1} parent=11 // pred_fallthru
          _
        // Predicated region
        $region17: #{tpu_custom_call.1} parent=11 // pred_check
          %p205 = pneg %p88
        $region18: #{tpu_custom_call.1} parent=11 // pred_check_branch
          %207 = sbr.rel (%p205) target = $region20
        $region19: #{tpu_custom_call.1} parent=11 // pred_region
          %s209 = ssub.s32 512, 512
          %210 = vsyncadd [#allocation6], %s209
          %s211 = sshll.u32 [#allocation7], 4
          %s212 = int_to_ptr.vmem [resolvable:$true] %s211
          %217 = dma.hbm_to_vmem [thread:$0]  %s2, 512, %s212, [#allocation6], 128, 128, 8
        $region20: #{tpu_custom_call.1} parent=11 // pred_fallthru
          _
        // Predicated region
        $region21: #{tpu_custom_call.1} parent=11 // pred_check
          %p218 = pneg %p109
        $region22: #{tpu_custom_call.1} parent=11 // pred_check_branch
          %220 = sbr.rel (%p218) target = $region24
        $region23: #{tpu_custom_call.1} parent=11 // pred_region
          %s222 = ssub.s32 512, 512
          %223 = vsyncadd [#allocation9], %s222
          %s224 = sshll.u32 [#allocation8], 4
          %s225 = int_to_ptr.vmem [resolvable:$true] %s224
          %230 = dma.hbm_to_vmem [thread:$0]  %s3, 512, %s225, [#allocation9], 128, 128, 8
        $region24: #{tpu_custom_call.1} parent=11 // pred_fallthru
          _
        // Predicated region
        $region25: #{tpu_custom_call.1} parent=11 // pred_check
          %p231 = pneg %p130
        $region26: #{tpu_custom_call.1} parent=11 // pred_check_branch
          %233 = sbr.rel (%p231) target = $region28
        $region27: #{tpu_custom_call.1} parent=11 // pred_region
          %s235 = ssub.s32 512, 512
          %236 = vsyncadd [#allocation9], %s235
          %s237 = sshll.u32 [#allocation10], 4
          %s238 = int_to_ptr.vmem [resolvable:$true] %s237
          %243 = dma.hbm_to_vmem [thread:$0]  %s4, 512, %s238, [#allocation9], 128, 128, 8
        $region28: #{tpu_custom_call.1} parent=11 // pred_fallthru
          _
        // Predicated region
        $region29: #{tpu_custom_call.1} parent=11 // pred_check
          %p244 = pneg %p151
        $region30: #{tpu_custom_call.1} parent=11 // pred_check_branch
          %246 = sbr.rel (%p244) target = $region32
        $region31: #{tpu_custom_call.1} parent=11 // pred_region
          _
        $region32: #{tpu_custom_call.1} parent=11 // pred_fallthru
          _
      $region12: #{tpu_custom_call.1} parent=5 // pred_fallthru
        _
      %p247 = scmp.lt.s32.totalorder %s20, 2
      // Predicated region
      $region33: #{tpu_custom_call.1} parent=5 // pred_check
        %p248 = pneg %p247
      $region34: #{tpu_custom_call.1} parent=5 // pred_check_branch
        %250 = sbr.rel (%p248) target = $region36
      $region35: #{tpu_custom_call.1} parent=5 // pred_region
        // Predicated region
        $region37: #{tpu_custom_call.1} parent=35 // pred_check
          %p251 = pneg %p40
        $region38: #{tpu_custom_call.1} parent=35 // pred_check_branch
          %253 = sbr.rel (%p251) target = $region40
        $region39: #{tpu_custom_call.1} parent=35 // pred_region
          %s254 = sand.u32 %s30, 1
          %s255 = scalar_lea.sflag [#allocation3], %s254
          %s256 = sand.u32 %s30, 1
          %s257 = smul.addr %s256, 8
          %s258 = scalar_lea.vmem [#allocation2], %s257
          %s260 = ssub.s32 128, 128
          %261 = vsyncadd %s255, %s260
          %s262 = smul.addr %s20, 128
          %s263 = scalar_lea.hbm %s0, %s262
          %s265 = sshll.u32 %s258, 4
          %s266 = int_to_ptr.vmem [resolvable:$true] %s265
          %268 = dma.hbm_to_vmem [thread:$0]  %s263, 128, %s266, %s255
        $region40: #{tpu_custom_call.1} parent=35 // pred_fallthru
          _
      $region36: #{tpu_custom_call.1} parent=5 // pred_fallthru
        _
      %p269 = scmp.le.s32.totalorder 1, %s20
      %p270 = scmp.lt.s32.totalorder %s20, 3
      %p271 = pnand %p269, %p270
      %p272 = pneg %p271
      // Predicated region
      $region41: #{tpu_custom_call.1} parent=5 // pred_check
        _
      $region42: #{tpu_custom_call.1} parent=5 // pred_check_branch
        %274 = sbr.rel (%p271) target = $region44
      $region43: #{tpu_custom_call.1} parent=5 // pred_region
        %s275 = ssub.s32 %s20, 1
        %s276 = sand.u32 %s33, 1
        %s277 = scalar_lea.sflag [#allocation3], %s276
        %s278 = sand.u32 %s33, 1
        %s279 = smul.addr %s278, 8
        %s280 = scalar_lea.vmem [#allocation2], %s279
        // Predicated region
        $region45: #{tpu_custom_call.1} parent=43 // pred_check
          %p281 = pneg %p46
        $region46: #{tpu_custom_call.1} parent=43 // pred_check_branch
          %283 = sbr.rel (%p281) target = $region48
        $region47: #{tpu_custom_call.1} parent=43 // pred_region
          %284 = dma.done %s277, 128
        $region48: #{tpu_custom_call.1} parent=43 // pred_fallthru
          _
        // Predicated region
        $region49: #{tpu_custom_call.1} parent=43 // pred_check
          %p285 = pneg %p67
        $region50: #{tpu_custom_call.1} parent=43 // pred_check_branch
          %287 = sbr.rel (%p285) target = $region52
        $region51: #{tpu_custom_call.1} parent=43 // pred_region
          %288 = dma.done [#allocation6], 512
        $region52: #{tpu_custom_call.1} parent=43 // pred_fallthru
          _
        // Predicated region
        $region53: #{tpu_custom_call.1} parent=43 // pred_check
          %p289 = pneg %p88
        $region54: #{tpu_custom_call.1} parent=43 // pred_check_branch
          %291 = sbr.rel (%p289) target = $region56
        $region55: #{tpu_custom_call.1} parent=43 // pred_region
          %292 = dma.done [#allocation6], 512
        $region56: #{tpu_custom_call.1} parent=43 // pred_fallthru
          _
        // Predicated region
        $region57: #{tpu_custom_call.1} parent=43 // pred_check
          %p293 = pneg %p109
        $region58: #{tpu_custom_call.1} parent=43 // pred_check_branch
          %295 = sbr.rel (%p293) target = $region60
        $region59: #{tpu_custom_call.1} parent=43 // pred_region
          %296 = dma.done [#allocation9], 512
        $region60: #{tpu_custom_call.1} parent=43 // pred_fallthru
          _
        // Predicated region
        $region61: #{tpu_custom_call.1} parent=43 // pred_check
          %p297 = pneg %p130
        $region62: #{tpu_custom_call.1} parent=43 // pred_check_branch
          %299 = sbr.rel (%p297) target = $region64
        $region63: #{tpu_custom_call.1} parent=43 // pred_region
          %300 = dma.done [#allocation9], 512
        $region64: #{tpu_custom_call.1} parent=43 // pred_fallthru
          _
        %s301 = sand.u32 %s33, 1
        %s302 = scalar_lea.sflag [#allocation3], %s301
        %s303 = sand.u32 %s33, 1
        %s304 = smul.addr %s303, 8
        %s305 = scalar_lea.vmem [#allocation2], %s304
        %p306 = pneg %p46
        %p307 = pneg %p43
        %p308 = pneg %p67
        %p309 = pneg %p64
        %p310 = pneg %p88
        %p311 = pneg %p85
        %p312 = pneg %p109
        %p313 = pneg %p106
        %p314 = pneg %p130
        %p315 = pneg %p127
        %p316 = pneg %p151
        %p317 = pneg %p148
        %p318 = pneg %p177
        %p319 = pneg %p174
        %s320 = sand.u32 %s164, 1
        %s321 = scalar_lea.sflag [#allocation4], %s320
        %s322 = sand.u32 %s164, 1
        %s323 = smul.addr %s322, 8
        %s324 = scalar_lea.vmem [#allocation11], %s323
        %v325 = vld [vmem:[%s280] sm:$0xff]
        %v326 = vld [vmem:[%s5] sm:$0x1]
        %v327 = vld [vmem:[%s5 + $0x1] sm:$0x1]
        %v328 = vld [vmem:[%s5 + $0x2] sm:$0x1]
        %v329 = vld [vmem:[%s5 + $0x3] sm:$0x1]
        %v330 = vld [vmem:[#allocation5] sm:$0xff]
        %v331 = vld [vmem:[#allocation5 + $0x8] sm:$0xff]
        %v332 = vld [vmem:[#allocation5 + $0x10] sm:$0xff]
        %v333 = vld [vmem:[#allocation5 + $0x18] sm:$0xff]
        %v334 = vlaneseq
        %v335 = vshrl.u32 %v334, 7
        %v336 = vsub.s32 0, %v335
        %v337 = vrot.slane %v326, %v336
        %vm338 = vcmask 261120
        %v340 = vsel %vm338, %v325, 0
        %342 = vmatprep.subr.mxu0 0.0
        %343 = vmatpush1.msra.mxu0 %v330
        %344 = vmatprep.subr.mxu0 0.0
        %345 = vmatpush1.msra.mxu0 %v331
        %346 = vmatprep.subr.mxu0 0.0
        %347 = vmatpush1.msra.mxu0 %v332
        %348 = vmatprep.subr.mxu0 0.0
        %349 = vmatpush1.msra.mxu0 %v333
        %350 = vmatprep.subr.mxu0 0.0
        %351 = vmatpush1.msra.mxu0 0.0
        %352 = vmatprep.subr.mxu0 0.0
        %353 = vmatpush1.msra.mxu0 0.0
        %354 = vmatprep.subr.mxu0 0.0
        %355 = vmatpush1.msra.mxu0 0.0
        %356 = vmatprep.subr.mxu0 0.0
        %357 = vmatpush1.msra.mxu0 0.0
        %358 = vmatprep.subr.mxu0 0.0
        %359 = vmatpush1.msra.mxu0 0.0
        %360 = vmatprep.subr.mxu0 0.0
        %361 = vmatpush1.msra.mxu0 0.0
        %362 = vmatprep.subr.mxu0 0.0
        %363 = vmatpush1.msra.mxu0 0.0
        %364 = vmatprep.subr.mxu0 0.0
        %365 = vmatpush1.msra.mxu0 0.0
        %366 = vmatprep.subr.mxu0 0.0
        %367 = vmatpush1.msra.mxu0 0.0
        %368 = vmatprep.subr.mxu0 0.0
        %369 = vmatpush1.msra.mxu0 0.0
        %370 = vmatprep.subr.mxu0 0.0
        %371 = vmatpush1.msra.mxu0 0.0
        %372 = vmatprep.subr.mxu0 0.0
        %373 = vmatpush1.msra.mxu0 0.0
        %374 = vmatprep.subr.mxu0 0.0
        %375 = vmatpush1.msra.mxu0 0.0
        %376 = vmatprep.subr.mxu0 0.0
        %377 = vmatpush1.msra.mxu0 0.0
        %378 = vmatprep.subr.mxu0 0.0
        %379 = vmatpush1.msra.mxu0 0.0
        %380 = vmatprep.subr.mxu0 0.0
        %381 = vmatpush1.msra.mxu0 0.0
        %382 = vmatprep.subr.mxu0 0.0
        %383 = vmatpush1.msra.mxu0 0.0
        %384 = vmatprep.subr.mxu0 0.0
        %385 = vmatpush1.msra.mxu0 0.0
        %386 = vmatprep.subr.mxu0 0.0
        %387 = vmatpush1.msra.mxu0 0.0
        %388 = vmatprep.subr.mxu0 0.0
        %389 = vmatpush1.msra.mxu0 0.0
        %390 = vmatprep.subr.mxu0 0.0
        %391 = vmatpush1.msra.mxu0 0.0
        %392 = vmatprep.subr.mxu0 0.0
        %393 = vmatpush1.msra.mxu0 0.0
        %394 = vmatprep.subr.mxu0 0.0
        %395 = vmatpush1.msra.mxu0 0.0
        %396 = vmatprep.subr.mxu0 0.0
        %397 = vmatpush1.msra.mxu0 0.0
        %398 = vmatprep.subr.mxu0 0.0
        %399 = vmatpush1.msra.mxu0 0.0
        %400 = vmatprep.subr.mxu0 0.0
        %401 = vmatpush1.msra.mxu0 0.0
        %402 = vmatprep.subr.mxu0 0.0
        %403 = vmatpush1.msra.mxu0 0.0
        %404 = vmatprep.subr.mxu0 0.0
        %405 = vmatpush1.msra.mxu0 0.0
        %406 = vmatprep.mubr.f32.mxu0 0.0
        %407 = vmatmul.mubr.f32.gmra.mrb[0].mxu0 %v340
        %v408 = vpop.f32.mrb[0].mxu0
        %v409 = vadd.f32 %v337, %v408
        %v410 = vpop.f32.mrb[0].mxu0
        %411 = vdwg.mxu0
        %v412 = vld [vmem:[#allocation7] sm:$0xff]
        %v413 = vld [vmem:[#allocation7 + $0x8] sm:$0xff]
        %v414 = vld [vmem:[#allocation7 + $0x10] sm:$0xff]
        %v415 = vld [vmem:[#allocation7 + $0x18] sm:$0xff]
        %v416 = vlaneseq
        %v417 = vshrl.u32 %v416, 7
        %v418 = vsub.s32 0, %v417
        %v419 = vrot.slane %v327, %v418
        %420 = vmatprep.subr.mxu0 0.0
        %421 = vmatpush1.msra.mxu0 %v412
        %422 = vmatprep.subr.mxu0 0.0
        %423 = vmatpush1.msra.mxu0 %v413
        %424 = vmatprep.subr.mxu0 0.0
        %425 = vmatpush1.msra.mxu0 %v414
        %426 = vmatprep.subr.mxu0 0.0
        %427 = vmatpush1.msra.mxu0 %v415
        %428 = vmatprep.subr.mxu0 0.0
        %429 = vmatpush1.msra.mxu0 0.0
        %430 = vmatprep.subr.mxu0 0.0
        %431 = vmatpush1.msra.mxu0 0.0
        %432 = vmatprep.subr.mxu0 0.0
        %433 = vmatpush1.msra.mxu0 0.0
        %434 = vmatprep.subr.mxu0 0.0
        %435 = vmatpush1.msra.mxu0 0.0
        %436 = vmatprep.subr.mxu0 0.0
        %437 = vmatpush1.msra.mxu0 0.0
        %438 = vmatprep.subr.mxu0 0.0
        %439 = vmatpush1.msra.mxu0 0.0
        %440 = vmatprep.subr.mxu0 0.0
        %441 = vmatpush1.msra.mxu0 0.0
        %442 = vmatprep.subr.mxu0 0.0
        %443 = vmatpush1.msra.mxu0 0.0
        %444 = vmatprep.subr.mxu0 0.0
        %445 = vmatpush1.msra.mxu0 0.0
        %446 = vmatprep.subr.mxu0 0.0
        %447 = vmatpush1.msra.mxu0 0.0
        %448 = vmatprep.subr.mxu0 0.0
        %449 = vmatpush1.msra.mxu0 0.0
        %450 = vmatprep.subr.mxu0 0.0
        %451 = vmatpush1.msra.mxu0 0.0
        %452 = vmatprep.subr.mxu0 0.0
        %453 = vmatpush1.msra.mxu0 0.0
        %454 = vmatprep.subr.mxu0 0.0
        %455 = vmatpush1.msra.mxu0 0.0
        %456 = vmatprep.subr.mxu0 0.0
        %457 = vmatpush1.msra.mxu0 0.0
        %458 = vmatprep.subr.mxu0 0.0
        %459 = vmatpush1.msra.mxu0 0.0
        %460 = vmatprep.subr.mxu0 0.0
        %461 = vmatpush1.msra.mxu0 0.0
        %462 = vmatprep.subr.mxu0 0.0
        %463 = vmatpush1.msra.mxu0 0.0
        %464 = vmatprep.subr.mxu0 0.0
        %465 = vmatpush1.msra.mxu0 0.0
        %466 = vmatprep.subr.mxu0 0.0
        %467 = vmatpush1.msra.mxu0 0.0
        %468 = vmatprep.subr.mxu0 0.0
        %469 = vmatpush1.msra.mxu0 0.0
        %470 = vmatprep.subr.mxu0 0.0
        %471 = vmatpush1.msra.mxu0 0.0
        %472 = vmatprep.subr.mxu0 0.0
        %473 = vmatpush1.msra.mxu0 0.0
        %474 = vmatprep.subr.mxu0 0.0
        %475 = vmatpush1.msra.mxu0 0.0
        %476 = vmatprep.subr.mxu0 0.0
        %477 = vmatpush1.msra.mxu0 0.0
        %478 = vmatprep.subr.mxu0 0.0
        %479 = vmatpush1.msra.mxu0 0.0
        %480 = vmatprep.subr.mxu0 0.0
        %481 = vmatpush1.msra.mxu0 0.0
        %482 = vmatprep.subr.mxu0 0.0
        %483 = vmatpush1.msra.mxu0 0.0
        %484 = vmatprep.mubr.f32.mxu0 0.0
        %485 = vmatmul.mubr.f32.gmra.mrb[0].mxu0 %v340
        %v486 = vpop.f32.mrb[0].mxu0
        %v487 = vadd.f32 %v419, %v486
        %v488 = vpop.f32.mrb[0].mxu0
        %489 = vdwg.mxu0
        %v490 = vld [vmem:[#allocation8] sm:$0xff]
        %v491 = vld [vmem:[#allocation8 + $0x8] sm:$0xff]
        %v492 = vld [vmem:[#allocation8 + $0x10] sm:$0xff]
        %v493 = vld [vmem:[#allocation8 + $0x18] sm:$0xff]
        %v494 = vlaneseq
        %v495 = vshrl.u32 %v494, 7
        %v496 = vsub.s32 0, %v495
        %v497 = vrot.slane %v328, %v496
        %498 = vmatprep.subr.mxu0 0.0
        %499 = vmatpush1.msra.mxu0 %v490
        %500 = vmatprep.subr.mxu0 0.0
        %501 = vmatpush1.msra.mxu0 %v491
        %502 = vmatprep.subr.mxu0 0.0
        %503 = vmatpush1.msra.mxu0 %v492
        %504 = vmatprep.subr.mxu0 0.0
        %505 = vmatpush1.msra.mxu0 %v493
        %506 = vmatprep.subr.mxu0 0.0
        %507 = vmatpush1.msra.mxu0 0.0
        %508 = vmatprep.subr.mxu0 0.0
        %509 = vmatpush1.msra.mxu0 0.0
        %510 = vmatprep.subr.mxu0 0.0
        %511 = vmatpush1.msra.mxu0 0.0
        %512 = vmatprep.subr.mxu0 0.0
        %513 = vmatpush1.msra.mxu0 0.0
        %514 = vmatprep.subr.mxu0 0.0
        %515 = vmatpush1.msra.mxu0 0.0
        %516 = vmatprep.subr.mxu0 0.0
        %517 = vmatpush1.msra.mxu0 0.0
        %518 = vmatprep.subr.mxu0 0.0
        %519 = vmatpush1.msra.mxu0 0.0
        %520 = vmatprep.subr.mxu0 0.0
        %521 = vmatpush1.msra.mxu0 0.0
        %522 = vmatprep.subr.mxu0 0.0
        %523 = vmatpush1.msra.mxu0 0.0
        %524 = vmatprep.subr.mxu0 0.0
        %525 = vmatpush1.msra.mxu0 0.0
        %526 = vmatprep.subr.mxu0 0.0
        %527 = vmatpush1.msra.mxu0 0.0
        %528 = vmatprep.subr.mxu0 0.0
        %529 = vmatpush1.msra.mxu0 0.0
        %530 = vmatprep.subr.mxu0 0.0
        %531 = vmatpush1.msra.mxu0 0.0
        %532 = vmatprep.subr.mxu0 0.0
        %533 = vmatpush1.msra.mxu0 0.0
        %534 = vmatprep.subr.mxu0 0.0
        %535 = vmatpush1.msra.mxu0 0.0
        %536 = vmatprep.subr.mxu0 0.0
        %537 = vmatpush1.msra.mxu0 0.0
        %538 = vmatprep.subr.mxu0 0.0
        %539 = vmatpush1.msra.mxu0 0.0
        %540 = vmatprep.subr.mxu0 0.0
        %541 = vmatpush1.msra.mxu0 0.0
        %542 = vmatprep.subr.mxu0 0.0
        %543 = vmatpush1.msra.mxu0 0.0
        %544 = vmatprep.subr.mxu0 0.0
        %545 = vmatpush1.msra.mxu0 0.0
        %546 = vmatprep.subr.mxu0 0.0
        %547 = vmatpush1.msra.mxu0 0.0
        %548 = vmatprep.subr.mxu0 0.0
        %549 = vmatpush1.msra.mxu0 0.0
        %550 = vmatprep.subr.mxu0 0.0
        %551 = vmatpush1.msra.mxu0 0.0
        %552 = vmatprep.subr.mxu0 0.0
        %553 = vmatpush1.msra.mxu0 0.0
        %554 = vmatprep.subr.mxu0 0.0
        %555 = vmatpush1.msra.mxu0 0.0
        %556 = vmatprep.subr.mxu0 0.0
        %557 = vmatpush1.msra.mxu0 0.0
        %558 = vmatprep.subr.mxu0 0.0
        %559 = vmatpush1.msra.mxu0 0.0
        %560 = vmatprep.subr.mxu0 0.0
        %561 = vmatpush1.msra.mxu0 0.0
        %562 = vmatprep.mubr.f32.mxu0 0.0
        %563 = vmatmul.mubr.f32.gmra.mrb[0].mxu0 %v340
        %v564 = vpop.f32.mrb[0].mxu0
        %v565 = vadd.f32 %v497, %v564
        %v566 = vpop.f32.mrb[0].mxu0
        %567 = vdwg.mxu0
        %569 = vrot.lane.b32.xlu0 %v409, 120
        %v570 = vpop.permute.xlu0 %569
        %571 = vrot.lane.b32.xlu0 %v409, 112
        %v572 = vpop.permute.xlu0 %571
        %573 = vrot.lane.b32.xlu0 %v409, 104
        %v574 = vpop.permute.xlu0 %573
        %576 = vrot.lane.b32.xlu0 %v487, 120
        %v577 = vpop.permute.xlu0 %576
        %578 = vrot.lane.b32.xlu0 %v487, 112
        %v579 = vpop.permute.xlu0 %578
        %580 = vrot.lane.b32.xlu0 %v487, 104
        %v581 = vpop.permute.xlu0 %580
        %583 = vrot.lane.b32.xlu0 %v565, 120
        %v584 = vpop.permute.xlu0 %583
        %586 = vrot.lane.b32.xlu0 %v565, 112
        %v587 = vpop.permute.xlu0 %586
        %589 = vrot.lane.b32.xlu0 %v565, 104
        %v590 = vpop.permute.xlu0 %589
        %vm592 = vcmask 64512
        %v593 = vsel %vm592, %v409, 0
        %v595 = vsel %vm592, %v487, 0
        %597 = vmatprep.subr.mxu0 0.0
        %598 = vmatpush1.xpose.msra.mxu0 %v595
        %599 = vmatprep.subr.mxu0 0.0
        %600 = vmatpush1.xpose.msra.mxu0 0.0
        %601 = vmatprep.subr.mxu0 0.0
        %602 = vmatpush1.xpose.msra.mxu0 0.0
        %603 = vmatprep.subr.mxu0 0.0
        %604 = vmatpush1.xpose.msra.mxu0 0.0
        %605 = vmatprep.subr.mxu0 0.0
        %606 = vmatpush1.xpose.msra.mxu0 0.0
        %607 = vmatprep.subr.mxu0 0.0
        %608 = vmatpush1.xpose.msra.mxu0 0.0
        %609 = vmatprep.subr.mxu0 0.0
        %610 = vmatpush1.xpose.msra.mxu0 0.0
        %611 = vmatprep.subr.mxu0 0.0
        %612 = vmatpush1.xpose.msra.mxu0 0.0
        %613 = vmatprep.subr.mxu0 0.0
        %614 = vmatpush1.xpose.msra.mxu0 0.0
        %615 = vmatprep.subr.mxu0 0.0
        %616 = vmatpush1.xpose.msra.mxu0 0.0
        %617 = vmatprep.subr.mxu0 0.0
        %618 = vmatpush1.xpose.msra.mxu0 0.0
        %619 = vmatprep.subr.mxu0 0.0
        %620 = vmatpush1.xpose.msra.mxu0 0.0
        %621 = vmatprep.subr.mxu0 0.0
        %622 = vmatpush1.xpose.msra.mxu0 0.0
        %623 = vmatprep.subr.mxu0 0.0
        %624 = vmatpush1.xpose.msra.mxu0 0.0
        %625 = vmatprep.subr.mxu0 0.0
        %626 = vmatpush1.xpose.msra.mxu0 0.0
        %627 = vmatprep.subr.mxu0 0.0
        %628 = vmatpush1.xpose.msra.mxu0 0.0
        %629 = vmatprep.subr.mxu0 0.0
        %630 = vmatpush1.xpose.msra.mxu0 0.0
        %631 = vmatprep.subr.mxu0 0.0
        %632 = vmatpush1.xpose.msra.mxu0 0.0
        %633 = vmatprep.subr.mxu0 0.0
        %634 = vmatpush1.xpose.msra.mxu0 0.0
        %635 = vmatprep.subr.mxu0 0.0
        %636 = vmatpush1.xpose.msra.mxu0 0.0
        %637 = vmatprep.subr.mxu0 0.0
        %638 = vmatpush1.xpose.msra.mxu0 0.0
        %639 = vmatprep.subr.mxu0 0.0
        %640 = vmatpush1.xpose.msra.mxu0 0.0
        %641 = vmatprep.subr.mxu0 0.0
        %642 = vmatpush1.xpose.msra.mxu0 0.0
        %643 = vmatprep.subr.mxu0 0.0
        %644 = vmatpush1.xpose.msra.mxu0 0.0
        %645 = vmatprep.subr.mxu0 0.0
        %646 = vmatpush1.xpose.msra.mxu0 0.0
        %647 = vmatprep.subr.mxu0 0.0
        %648 = vmatpush1.xpose.msra.mxu0 0.0
        %649 = vmatprep.subr.mxu0 0.0
        %650 = vmatpush1.xpose.msra.mxu0 0.0
        %651 = vmatprep.subr.mxu0 0.0
        %652 = vmatpush1.xpose.msra.mxu0 0.0
        %653 = vmatprep.subr.mxu0 0.0
        %654 = vmatpush1.xpose.msra.mxu0 0.0
        %655 = vmatprep.subr.mxu0 0.0
        %656 = vmatpush1.xpose.msra.mxu0 0.0
        %657 = vmatprep.subr.mxu0 0.0
        %658 = vmatpush1.xpose.msra.mxu0 0.0
        %659 = vmatprep.subr.mxu0 0.0
        %660 = vmatpush1.xpose.msra.mxu0 0.0
        %661 = vmatprep.mubr.f32.mxu0 0.0
        %662 = vmatmul.mubr.f32.gmra.mrb[0].mxu0 %v593
        %v663 = vpop.f32.mrb[0].mxu0
        %v664 = vadd.f32 0.0, %v663
        %v665 = vpop.f32.mrb[0].mxu0
        %666 = vdwg.mxu0
        %v667 = vsel %vm592, %v570, 0
        %v669 = vsel %vm592, %v577, 0
        %671 = vmatprep.subr.mxu0 0.0
        %672 = vmatpush1.xpose.msra.mxu0 %v669
        %673 = vmatprep.subr.mxu0 0.0
        %674 = vmatpush1.xpose.msra.mxu0 0.0
        %675 = vmatprep.subr.mxu0 0.0
        %676 = vmatpush1.xpose.msra.mxu0 0.0
        %677 = vmatprep.subr.mxu0 0.0
        %678 = vmatpush1.xpose.msra.mxu0 0.0
        %679 = vmatprep.subr.mxu0 0.0
        %680 = vmatpush1.xpose.msra.mxu0 0.0
        %681 = vmatprep.subr.mxu0 0.0
        %682 = vmatpush1.xpose.msra.mxu0 0.0
        %683 = vmatprep.subr.mxu0 0.0
        %684 = vmatpush1.xpose.msra.mxu0 0.0
        %685 = vmatprep.subr.mxu0 0.0
        %686 = vmatpush1.xpose.msra.mxu0 0.0
        %687 = vmatprep.subr.mxu0 0.0
        %688 = vmatpush1.xpose.msra.mxu0 0.0
        %689 = vmatprep.subr.mxu0 0.0
        %690 = vmatpush1.xpose.msra.mxu0 0.0
        %691 = vmatprep.subr.mxu0 0.0
        %692 = vmatpush1.xpose.msra.mxu0 0.0
        %693 = vmatprep.subr.mxu0 0.0
        %694 = vmatpush1.xpose.msra.mxu0 0.0
        %695 = vmatprep.subr.mxu0 0.0
        %696 = vmatpush1.xpose.msra.mxu0 0.0
        %697 = vmatprep.subr.mxu0 0.0
        %698 = vmatpush1.xpose.msra.mxu0 0.0
        %699 = vmatprep.subr.mxu0 0.0
        %700 = vmatpush1.xpose.msra.mxu0 0.0
        %701 = vmatprep.subr.mxu0 0.0
        %702 = vmatpush1.xpose.msra.mxu0 0.0
        %703 = vmatprep.subr.mxu0 0.0
        %704 = vmatpush1.xpose.msra.mxu0 0.0
        %705 = vmatprep.subr.mxu0 0.0
        %706 = vmatpush1.xpose.msra.mxu0 0.0
        %707 = vmatprep.subr.mxu0 0.0
        %708 = vmatpush1.xpose.msra.mxu0 0.0
        %709 = vmatprep.subr.mxu0 0.0
        %710 = vmatpush1.xpose.msra.mxu0 0.0
        %711 = vmatprep.subr.mxu0 0.0
        %712 = vmatpush1.xpose.msra.mxu0 0.0
        %713 = vmatprep.subr.mxu0 0.0
        %714 = vmatpush1.xpose.msra.mxu0 0.0
        %715 = vmatprep.subr.mxu0 0.0
        %716 = vmatpush1.xpose.msra.mxu0 0.0
        %717 = vmatprep.subr.mxu0 0.0
        %718 = vmatpush1.xpose.msra.mxu0 0.0
        %719 = vmatprep.subr.mxu0 0.0
        %720 = vmatpush1.xpose.msra.mxu0 0.0
        %721 = vmatprep.subr.mxu0 0.0
        %722 = vmatpush1.xpose.msra.mxu0 0.0
        %723 = vmatprep.subr.mxu0 0.0
        %724 = vmatpush1.xpose.msra.mxu0 0.0
        %725 = vmatprep.subr.mxu0 0.0
        %726 = vmatpush1.xpose.msra.mxu0 0.0
        %727 = vmatprep.subr.mxu0 0.0
        %728 = vmatpush1.xpose.msra.mxu0 0.0
        %729 = vmatprep.subr.mxu0 0.0
        %730 = vmatpush1.xpose.msra.mxu0 0.0
        %731 = vmatprep.subr.mxu0 0.0
        %732 = vmatpush1.xpose.msra.mxu0 0.0
        %733 = vmatprep.subr.mxu0 0.0
        %734 = vmatpush1.xpose.msra.mxu0 0.0
        %735 = vmatprep.mubr.f32.mxu0 0.0
        %736 = vmatmul.mubr.f32.gmra.mrb[0].mxu0 %v667
        %v737 = vpop.f32.mrb[0].mxu0
        %v738 = vadd.f32 0.0, %v737
        %v739 = vpop.f32.mrb[0].mxu0
        %740 = vdwg.mxu0
        %v741 = vsel %vm592, %v572, 0
        %v743 = vsel %vm592, %v579, 0
        %745 = vmatprep.subr.mxu0 0.0
        %746 = vmatpush1.xpose.msra.mxu0 %v743
        %747 = vmatprep.subr.mxu0 0.0
        %748 = vmatpush1.xpose.msra.mxu0 0.0
        %749 = vmatprep.subr.mxu0 0.0
        %750 = vmatpush1.xpose.msra.mxu0 0.0
        %751 = vmatprep.subr.mxu0 0.0
        %752 = vmatpush1.xpose.msra.mxu0 0.0
        %753 = vmatprep.subr.mxu0 0.0
        %754 = vmatpush1.xpose.msra.mxu0 0.0
        %755 = vmatprep.subr.mxu0 0.0
        %756 = vmatpush1.xpose.msra.mxu0 0.0
        %757 = vmatprep.subr.mxu0 0.0
        %758 = vmatpush1.xpose.msra.mxu0 0.0
        %759 = vmatprep.subr.mxu0 0.0
        %760 = vmatpush1.xpose.msra.mxu0 0.0
        %761 = vmatprep.subr.mxu0 0.0
        %762 = vmatpush1.xpose.msra.mxu0 0.0
        %763 = vmatprep.subr.mxu0 0.0
        %764 = vmatpush1.xpose.msra.mxu0 0.0
        %765 = vmatprep.subr.mxu0 0.0
        %766 = vmatpush1.xpose.msra.mxu0 0.0
        %767 = vmatprep.subr.mxu0 0.0
        %768 = vmatpush1.xpose.msra.mxu0 0.0
        %769 = vmatprep.subr.mxu0 0.0
        %770 = vmatpush1.xpose.msra.mxu0 0.0
        %771 = vmatprep.subr.mxu0 0.0
        %772 = vmatpush1.xpose.msra.mxu0 0.0
        %773 = vmatprep.subr.mxu0 0.0
        %774 = vmatpush1.xpose.msra.mxu0 0.0
        %775 = vmatprep.subr.mxu0 0.0
        %776 = vmatpush1.xpose.msra.mxu0 0.0
        %777 = vmatprep.subr.mxu0 0.0
        %778 = vmatpush1.xpose.msra.mxu0 0.0
        %779 = vmatprep.subr.mxu0 0.0
        %780 = vmatpush1.xpose.msra.mxu0 0.0
        %781 = vmatprep.subr.mxu0 0.0
        %782 = vmatpush1.xpose.msra.mxu0 0.0
        %783 = vmatprep.subr.mxu0 0.0
        %784 = vmatpush1.xpose.msra.mxu0 0.0
        %785 = vmatprep.subr.mxu0 0.0
        %786 = vmatpush1.xpose.msra.mxu0 0.0
        %787 = vmatprep.subr.mxu0 0.0
        %788 = vmatpush1.xpose.msra.mxu0 0.0
        %789 = vmatprep.subr.mxu0 0.0
        %790 = vmatpush1.xpose.msra.mxu0 0.0
        %791 = vmatprep.subr.mxu0 0.0
        %792 = vmatpush1.xpose.msra.mxu0 0.0
        %793 = vmatprep.subr.mxu0 0.0
        %794 = vmatpush1.xpose.msra.mxu0 0.0
        %795 = vmatprep.subr.mxu0 0.0
        %796 = vmatpush1.xpose.msra.mxu0 0.0
        %797 = vmatprep.subr.mxu0 0.0
        %798 = vmatpush1.xpose.msra.mxu0 0.0
        %799 = vmatprep.subr.mxu0 0.0
        %800 = vmatpush1.xpose.msra.mxu0 0.0
        %801 = vmatprep.subr.mxu0 0.0
        %802 = vmatpush1.xpose.msra.mxu0 0.0
        %803 = vmatprep.subr.mxu0 0.0
        %804 = vmatpush1.xpose.msra.mxu0 0.0
        %805 = vmatprep.subr.mxu0 0.0
        %806 = vmatpush1.xpose.msra.mxu0 0.0
        %807 = vmatprep.subr.mxu0 0.0
        %808 = vmatpush1.xpose.msra.mxu0 0.0
        %809 = vmatprep.mubr.f32.mxu0 0.0
        %810 = vmatmul.mubr.f32.gmra.mrb[0].mxu0 %v741
        %v811 = vpop.f32.mrb[0].mxu0
        %v812 = vadd.f32 0.0, %v811
        %v813 = vpop.f32.mrb[0].mxu0
        %814 = vdwg.mxu0
        %v815 = vsel %vm592, %v574, 0
        %v817 = vsel %vm592, %v581, 0
        %819 = vmatprep.subr.mxu0 0.0
        %820 = vmatpush1.xpose.msra.mxu0 %v817
        %821 = vmatprep.subr.mxu0 0.0
        %822 = vmatpush1.xpose.msra.mxu0 0.0
        %823 = vmatprep.subr.mxu0 0.0
        %824 = vmatpush1.xpose.msra.mxu0 0.0
        %825 = vmatprep.subr.mxu0 0.0
        %826 = vmatpush1.xpose.msra.mxu0 0.0
        %827 = vmatprep.subr.mxu0 0.0
        %828 = vmatpush1.xpose.msra.mxu0 0.0
        %829 = vmatprep.subr.mxu0 0.0
        %830 = vmatpush1.xpose.msra.mxu0 0.0
        %831 = vmatprep.subr.mxu0 0.0
        %832 = vmatpush1.xpose.msra.mxu0 0.0
        %833 = vmatprep.subr.mxu0 0.0
        %834 = vmatpush1.xpose.msra.mxu0 0.0
        %835 = vmatprep.subr.mxu0 0.0
        %836 = vmatpush1.xpose.msra.mxu0 0.0
        %837 = vmatprep.subr.mxu0 0.0
        %838 = vmatpush1.xpose.msra.mxu0 0.0
        %839 = vmatprep.subr.mxu0 0.0
        %840 = vmatpush1.xpose.msra.mxu0 0.0
        %841 = vmatprep.subr.mxu0 0.0
        %842 = vmatpush1.xpose.msra.mxu0 0.0
        %843 = vmatprep.subr.mxu0 0.0
        %844 = vmatpush1.xpose.msra.mxu0 0.0
        %845 = vmatprep.subr.mxu0 0.0
        %846 = vmatpush1.xpose.msra.mxu0 0.0
        %847 = vmatprep.subr.mxu0 0.0
        %848 = vmatpush1.xpose.msra.mxu0 0.0
        %849 = vmatprep.subr.mxu0 0.0
        %850 = vmatpush1.xpose.msra.mxu0 0.0
        %851 = vmatprep.subr.mxu0 0.0
        %852 = vmatpush1.xpose.msra.mxu0 0.0
        %853 = vmatprep.subr.mxu0 0.0
        %854 = vmatpush1.xpose.msra.mxu0 0.0
        %855 = vmatprep.subr.mxu0 0.0
        %856 = vmatpush1.xpose.msra.mxu0 0.0
        %857 = vmatprep.subr.mxu0 0.0
        %858 = vmatpush1.xpose.msra.mxu0 0.0
        %859 = vmatprep.subr.mxu0 0.0
        %860 = vmatpush1.xpose.msra.mxu0 0.0
        %861 = vmatprep.subr.mxu0 0.0
        %862 = vmatpush1.xpose.msra.mxu0 0.0
        %863 = vmatprep.subr.mxu0 0.0
        %864 = vmatpush1.xpose.msra.mxu0 0.0
        %865 = vmatprep.subr.mxu0 0.0
        %866 = vmatpush1.xpose.msra.mxu0 0.0
        %867 = vmatprep.subr.mxu0 0.0
        %868 = vmatpush1.xpose.msra.mxu0 0.0
        %869 = vmatprep.subr.mxu0 0.0
        %870 = vmatpush1.xpose.msra.mxu0 0.0
        %871 = vmatprep.subr.mxu0 0.0
        %872 = vmatpush1.xpose.msra.mxu0 0.0
        %873 = vmatprep.subr.mxu0 0.0
        %874 = vmatpush1.xpose.msra.mxu0 0.0
        %875 = vmatprep.subr.mxu0 0.0
        %876 = vmatpush1.xpose.msra.mxu0 0.0
        %877 = vmatprep.subr.mxu0 0.0
        %878 = vmatpush1.xpose.msra.mxu0 0.0
        %879 = vmatprep.subr.mxu0 0.0
        %880 = vmatpush1.xpose.msra.mxu0 0.0
        %881 = vmatprep.subr.mxu0 0.0
        %882 = vmatpush1.xpose.msra.mxu0 0.0
        %883 = vmatprep.mubr.f32.mxu0 0.0
        %884 = vmatmul.mubr.f32.gmra.mrb[0].mxu0 %v815
        %v885 = vpop.f32.mrb[0].mxu0
        %v886 = vadd.f32 0.0, %v885
        %v887 = vpop.f32.mrb[0].mxu0
        %888 = vdwg.mxu0
        %v889 = vsel %vm592, %v664, -inf
        %890 = vmax.xlane.f32.xlu0 %v889
        %v891 = vpop.xlane.xlu0 %890
        %v892 = vsel %vm592, %v738, -inf
        %893 = vmax.xlane.f32.xlu0 %v892
        %v894 = vpop.xlane.xlu0 %893
        %v895 = vsel %vm592, %v812, -inf
        %896 = vmax.xlane.f32.xlu0 %v895
        %v897 = vpop.xlane.xlu0 %896
        %v898 = vsel %vm592, %v886, -inf
        %899 = vmax.xlane.f32.xlu0 %v898
        %v900 = vpop.xlane.xlu0 %899
        %v901 = vsub.f32 %v664, %v891
        %v902 = vsub.f32 %v738, %v894
        %v903 = vsub.f32 %v812, %v897
        %v904 = vsub.f32 %v886, %v900
        %v905 = vmul.f32 %v901, 1.442695
        %v906 = vpow.pop %v905
        %v907 = vmul.f32 %v902, 1.442695
        %v908 = vpow.pop %v907
        %v909 = vmul.f32 %v903, 1.442695
        %v910 = vpow.pop %v909
        %v911 = vmul.f32 %v904, 1.442695
        %v912 = vpow.pop %v911
        %v913 = vsel %vm592, %v906, 0.0
        %914 = vadd.xlane.f32.xlu0 %v913
        %v915 = vpop.xlane.xlu0 %914
        %v916 = vsel %vm592, %v908, 0.0
        %917 = vadd.xlane.f32.xlu0 %v916
        %v918 = vpop.xlane.xlu0 %917
        %v919 = vsel %vm592, %v910, 0.0
        %920 = vadd.xlane.f32.xlu0 %v919
        %v921 = vpop.xlane.xlu0 %920
        %v922 = vsel %vm592, %v912, 0.0
        %923 = vadd.xlane.f32.xlu0 %v922
        %v924 = vpop.xlane.xlu0 %923
        %v925 = vrcp.pop %v915
        %v926 = vrcp.pop %v918
        %v927 = vrcp.pop %v921
        %v928 = vrcp.pop %v924
        %v930 = vsel %vm592, %v906, 0
        %932 = vmatprep.subr.mxu0 0.0
        %933 = vmatpush1.msra.mxu0 %v565
        %934 = vmatprep.subr.mxu0 0.0
        %935 = vmatpush1.msra.mxu0 0.0
        %936 = vmatprep.subr.mxu0 0.0
        %937 = vmatpush1.msra.mxu0 0.0
        %938 = vmatprep.subr.mxu0 0.0
        %939 = vmatpush1.msra.mxu0 0.0
        %940 = vmatprep.subr.mxu0 0.0
        %941 = vmatpush1.msra.mxu0 0.0
        %942 = vmatprep.subr.mxu0 0.0
        %943 = vmatpush1.msra.mxu0 0.0
        %944 = vmatprep.subr.mxu0 0.0
        %945 = vmatpush1.msra.mxu0 0.0
        %946 = vmatprep.subr.mxu0 0.0
        %947 = vmatpush1.msra.mxu0 0.0
        %948 = vmatprep.subr.mxu0 0.0
        %949 = vmatpush1.msra.mxu0 0.0
        %950 = vmatprep.subr.mxu0 0.0
        %951 = vmatpush1.msra.mxu0 0.0
        %952 = vmatprep.subr.mxu0 0.0
        %953 = vmatpush1.msra.mxu0 0.0
        %954 = vmatprep.subr.mxu0 0.0
        %955 = vmatpush1.msra.mxu0 0.0
        %956 = vmatprep.subr.mxu0 0.0
        %957 = vmatpush1.msra.mxu0 0.0
        %958 = vmatprep.subr.mxu0 0.0
        %959 = vmatpush1.msra.mxu0 0.0
        %960 = vmatprep.subr.mxu0 0.0
        %961 = vmatpush1.msra.mxu0 0.0
        %962 = vmatprep.subr.mxu0 0.0
        %963 = vmatpush1.msra.mxu0 0.0
        %964 = vmatprep.subr.mxu0 0.0
        %965 = vmatpush1.msra.mxu0 0.0
        %966 = vmatprep.subr.mxu0 0.0
        %967 = vmatpush1.msra.mxu0 0.0
        %968 = vmatprep.subr.mxu0 0.0
        %969 = vmatpush1.msra.mxu0 0.0
        %970 = vmatprep.subr.mxu0 0.0
        %971 = vmatpush1.msra.mxu0 0.0
        %972 = vmatprep.subr.mxu0 0.0
        %973 = vmatpush1.msra.mxu0 0.0
        %974 = vmatprep.subr.mxu0 0.0
        %975 = vmatpush1.msra.mxu0 0.0
        %976 = vmatprep.subr.mxu0 0.0
        %977 = vmatpush1.msra.mxu0 0.0
        %978 = vmatprep.subr.mxu0 0.0
        %979 = vmatpush1.msra.mxu0 0.0
        %980 = vmatprep.subr.mxu0 0.0
        %981 = vmatpush1.msra.mxu0 0.0
        %982 = vmatprep.subr.mxu0 0.0
        %983 = vmatpush1.msra.mxu0 0.0
        %984 = vmatprep.subr.mxu0 0.0
        %985 = vmatpush1.msra.mxu0 0.0
        %986 = vmatprep.subr.mxu0 0.0
        %987 = vmatpush1.msra.mxu0 0.0
        %988 = vmatprep.subr.mxu0 0.0
        %989 = vmatpush1.msra.mxu0 0.0
        %990 = vmatprep.subr.mxu0 0.0
        %991 = vmatpush1.msra.mxu0 0.0
        %992 = vmatprep.subr.mxu0 0.0
        %993 = vmatpush1.msra.mxu0 0.0
        %994 = vmatprep.subr.mxu0 0.0
        %995 = vmatpush1.msra.mxu0 0.0
        %996 = vmatprep.mubr.f32.mxu0 0.0
        %997 = vmatmul.mubr.f32.gmra.mrb[0].mxu0 %v930
        %v998 = vpop.f32.mrb[0].mxu0
        %v999 = vadd.f32 0.0, %v998
        %v1000 = vpop.f32.mrb[0].mxu0
        %1001 = vdwg.mxu0
        %v1003 = vsel %vm592, %v908, 0
        %1005 = vmatprep.subr.mxu0 0.0
        %1006 = vmatpush1.msra.mxu0 %v584
        %1007 = vmatprep.subr.mxu0 0.0
        %1008 = vmatpush1.msra.mxu0 0.0
        %1009 = vmatprep.subr.mxu0 0.0
        %1010 = vmatpush1.msra.mxu0 0.0
        %1011 = vmatprep.subr.mxu0 0.0
        %1012 = vmatpush1.msra.mxu0 0.0
        %1013 = vmatprep.subr.mxu0 0.0
        %1014 = vmatpush1.msra.mxu0 0.0
        %1015 = vmatprep.subr.mxu0 0.0
        %1016 = vmatpush1.msra.mxu0 0.0
        %1017 = vmatprep.subr.mxu0 0.0
        %1018 = vmatpush1.msra.mxu0 0.0
        %1019 = vmatprep.subr.mxu0 0.0
        %1020 = vmatpush1.msra.mxu0 0.0
        %1021 = vmatprep.subr.mxu0 0.0
        %1022 = vmatpush1.msra.mxu0 0.0
        %1023 = vmatprep.subr.mxu0 0.0
        %1024 = vmatpush1.msra.mxu0 0.0
        %1025 = vmatprep.subr.mxu0 0.0
        %1026 = vmatpush1.msra.mxu0 0.0
        %1027 = vmatprep.subr.mxu0 0.0
        %1028 = vmatpush1.msra.mxu0 0.0
        %1029 = vmatprep.subr.mxu0 0.0
        %1030 = vmatpush1.msra.mxu0 0.0
        %1031 = vmatprep.subr.mxu0 0.0
        %1032 = vmatpush1.msra.mxu0 0.0
        %1033 = vmatprep.subr.mxu0 0.0
        %1034 = vmatpush1.msra.mxu0 0.0
        %1035 = vmatprep.subr.mxu0 0.0
        %1036 = vmatpush1.msra.mxu0 0.0
        %1037 = vmatprep.subr.mxu0 0.0
        %1038 = vmatpush1.msra.mxu0 0.0
        %1039 = vmatprep.subr.mxu0 0.0
        %1040 = vmatpush1.msra.mxu0 0.0
        %1041 = vmatprep.subr.mxu0 0.0
        %1042 = vmatpush1.msra.mxu0 0.0
        %1043 = vmatprep.subr.mxu0 0.0
        %1044 = vmatpush1.msra.mxu0 0.0
        %1045 = vmatprep.subr.mxu0 0.0
        %1046 = vmatpush1.msra.mxu0 0.0
        %1047 = vmatprep.subr.mxu0 0.0
        %1048 = vmatpush1.msra.mxu0 0.0
        %1049 = vmatprep.subr.mxu0 0.0
        %1050 = vmatpush1.msra.mxu0 0.0
        %1051 = vmatprep.subr.mxu0 0.0
        %1052 = vmatpush1.msra.mxu0 0.0
        %1053 = vmatprep.subr.mxu0 0.0
        %1054 = vmatpush1.msra.mxu0 0.0
        %1055 = vmatprep.subr.mxu0 0.0
        %1056 = vmatpush1.msra.mxu0 0.0
        %1057 = vmatprep.subr.mxu0 0.0
        %1058 = vmatpush1.msra.mxu0 0.0
        %1059 = vmatprep.subr.mxu0 0.0
        %1060 = vmatpush1.msra.mxu0 0.0
        %1061 = vmatprep.subr.mxu0 0.0
        %1062 = vmatpush1.msra.mxu0 0.0
        %1063 = vmatprep.subr.mxu0 0.0
        %1064 = vmatpush1.msra.mxu0 0.0
        %1065 = vmatprep.subr.mxu0 0.0
        %1066 = vmatpush1.msra.mxu0 0.0
        %1067 = vmatprep.subr.mxu0 0.0
        %1068 = vmatpush1.msra.mxu0 0.0
        %1069 = vmatprep.mubr.f32.mxu0 0.0
        %1070 = vmatmul.mubr.f32.gmra.mrb[0].mxu0 %v1003
        %v1071 = vpop.f32.mrb[0].mxu0
        %v1072 = vadd.f32 0.0, %v1071
        %v1073 = vpop.f32.mrb[0].mxu0
        %1074 = vdwg.mxu0
        %v1076 = vsel %vm592, %v910, 0
        %1078 = vmatprep.subr.mxu0 0.0
        %1079 = vmatpush1.msra.mxu0 %v587
        %1080 = vmatprep.subr.mxu0 0.0
        %1081 = vmatpush1.msra.mxu0 0.0
        %1082 = vmatprep.subr.mxu0 0.0
        %1083 = vmatpush1.msra.mxu0 0.0
        %1084 = vmatprep.subr.mxu0 0.0
        %1085 = vmatpush1.msra.mxu0 0.0
        %1086 = vmatprep.subr.mxu0 0.0
        %1087 = vmatpush1.msra.mxu0 0.0
        %1088 = vmatprep.subr.mxu0 0.0
        %1089 = vmatpush1.msra.mxu0 0.0
        %1090 = vmatprep.subr.mxu0 0.0
        %1091 = vmatpush1.msra.mxu0 0.0
        %1092 = vmatprep.subr.mxu0 0.0
        %1093 = vmatpush1.msra.mxu0 0.0
        %1094 = vmatprep.subr.mxu0 0.0
        %1095 = vmatpush1.msra.mxu0 0.0
        %1096 = vmatprep.subr.mxu0 0.0
        %1097 = vmatpush1.msra.mxu0 0.0
        %1098 = vmatprep.subr.mxu0 0.0
        %1099 = vmatpush1.msra.mxu0 0.0
        %1100 = vmatprep.subr.mxu0 0.0
        %1101 = vmatpush1.msra.mxu0 0.0
        %1102 = vmatprep.subr.mxu0 0.0
        %1103 = vmatpush1.msra.mxu0 0.0
        %1104 = vmatprep.subr.mxu0 0.0
        %1105 = vmatpush1.msra.mxu0 0.0
        %1106 = vmatprep.subr.mxu0 0.0
        %1107 = vmatpush1.msra.mxu0 0.0
        %1108 = vmatprep.subr.mxu0 0.0
        %1109 = vmatpush1.msra.mxu0 0.0
        %1110 = vmatprep.subr.mxu0 0.0
        %1111 = vmatpush1.msra.mxu0 0.0
        %1112 = vmatprep.subr.mxu0 0.0
        %1113 = vmatpush1.msra.mxu0 0.0
        %1114 = vmatprep.subr.mxu0 0.0
        %1115 = vmatpush1.msra.mxu0 0.0
        %1116 = vmatprep.subr.mxu0 0.0
        %1117 = vmatpush1.msra.mxu0 0.0
        %1118 = vmatprep.subr.mxu0 0.0
        %1119 = vmatpush1.msra.mxu0 0.0
        %1120 = vmatprep.subr.mxu0 0.0
        %1121 = vmatpush1.msra.mxu0 0.0
        %1122 = vmatprep.subr.mxu0 0.0
        %1123 = vmatpush1.msra.mxu0 0.0
        %1124 = vmatprep.subr.mxu0 0.0
        %1125 = vmatpush1.msra.mxu0 0.0
        %1126 = vmatprep.subr.mxu0 0.0
        %1127 = vmatpush1.msra.mxu0 0.0
        %1128 = vmatprep.subr.mxu0 0.0
        %1129 = vmatpush1.msra.mxu0 0.0
        %1130 = vmatprep.subr.mxu0 0.0
        %1131 = vmatpush1.msra.mxu0 0.0
        %1132 = vmatprep.subr.mxu0 0.0
        %1133 = vmatpush1.msra.mxu0 0.0
        %1134 = vmatprep.subr.mxu0 0.0
        %1135 = vmatpush1.msra.mxu0 0.0
        %1136 = vmatprep.subr.mxu0 0.0
        %1137 = vmatpush1.msra.mxu0 0.0
        %1138 = vmatprep.subr.mxu0 0.0
        %1139 = vmatpush1.msra.mxu0 0.0
        %1140 = vmatprep.subr.mxu0 0.0
        %1141 = vmatpush1.msra.mxu0 0.0
        %1142 = vmatprep.mubr.f32.mxu0 0.0
        %1143 = vmatmul.mubr.f32.gmra.mrb[0].mxu0 %v1076
        %v1144 = vpop.f32.mrb[0].mxu0
        %v1145 = vadd.f32 0.0, %v1144
        %v1146 = vpop.f32.mrb[0].mxu0
        %1147 = vdwg.mxu0
        %v1149 = vsel %vm592, %v912, 0
        %1151 = vmatprep.subr.mxu0 0.0
        %1152 = vmatpush1.msra.mxu0 %v590
        %1153 = vmatprep.subr.mxu0 0.0
        %1154 = vmatpush1.msra.mxu0 0.0
        %1155 = vmatprep.subr.mxu0 0.0
        %1156 = vmatpush1.msra.mxu0 0.0
        %1157 = vmatprep.subr.mxu0 0.0
        %1158 = vmatpush1.msra.mxu0 0.0
        %1159 = vmatprep.subr.mxu0 0.0
        %1160 = vmatpush1.msra.mxu0 0.0
        %1161 = vmatprep.subr.mxu0 0.0
        %1162 = vmatpush1.msra.mxu0 0.0
        %1163 = vmatprep.subr.mxu0 0.0
        %1164 = vmatpush1.msra.mxu0 0.0
        %1165 = vmatprep.subr.mxu0 0.0
        %1166 = vmatpush1.msra.mxu0 0.0
        %1167 = vmatprep.subr.mxu0 0.0
        %1168 = vmatpush1.msra.mxu0 0.0
        %1169 = vmatprep.subr.mxu0 0.0
        %1170 = vmatpush1.msra.mxu0 0.0
        %1171 = vmatprep.subr.mxu0 0.0
        %1172 = vmatpush1.msra.mxu0 0.0
        %1173 = vmatprep.subr.mxu0 0.0
        %1174 = vmatpush1.msra.mxu0 0.0
        %1175 = vmatprep.subr.mxu0 0.0
        %1176 = vmatpush1.msra.mxu0 0.0
        %1177 = vmatprep.subr.mxu0 0.0
        %1178 = vmatpush1.msra.mxu0 0.0
        %1179 = vmatprep.subr.mxu0 0.0
        %1180 = vmatpush1.msra.mxu0 0.0
        %1181 = vmatprep.subr.mxu0 0.0
        %1182 = vmatpush1.msra.mxu0 0.0
        %1183 = vmatprep.subr.mxu0 0.0
        %1184 = vmatpush1.msra.mxu0 0.0
        %1185 = vmatprep.subr.mxu0 0.0
        %1186 = vmatpush1.msra.mxu0 0.0
        %1187 = vmatprep.subr.mxu0 0.0
        %1188 = vmatpush1.msra.mxu0 0.0
        %1189 = vmatprep.subr.mxu0 0.0
        %1190 = vmatpush1.msra.mxu0 0.0
        %1191 = vmatprep.subr.mxu0 0.0
        %1192 = vmatpush1.msra.mxu0 0.0
        %1193 = vmatprep.subr.mxu0 0.0
        %1194 = vmatpush1.msra.mxu0 0.0
        %1195 = vmatprep.subr.mxu0 0.0
        %1196 = vmatpush1.msra.mxu0 0.0
        %1197 = vmatprep.subr.mxu0 0.0
        %1198 = vmatpush1.msra.mxu0 0.0
        %1199 = vmatprep.subr.mxu0 0.0
        %1200 = vmatpush1.msra.mxu0 0.0
        %1201 = vmatprep.subr.mxu0 0.0
        %1202 = vmatpush1.msra.mxu0 0.0
        %1203 = vmatprep.subr.mxu0 0.0
        %1204 = vmatpush1.msra.mxu0 0.0
        %1205 = vmatprep.subr.mxu0 0.0
        %1206 = vmatpush1.msra.mxu0 0.0
        %1207 = vmatprep.subr.mxu0 0.0
        %1208 = vmatpush1.msra.mxu0 0.0
        %1209 = vmatprep.subr.mxu0 0.0
        %1210 = vmatpush1.msra.mxu0 0.0
        %1211 = vmatprep.subr.mxu0 0.0
        %1212 = vmatpush1.msra.mxu0 0.0
        %1213 = vmatprep.subr.mxu0 0.0
        %1214 = vmatpush1.msra.mxu0 0.0
        %1215 = vmatprep.mubr.f32.mxu0 0.0
        %1216 = vmatmul.mubr.f32.gmra.mrb[0].mxu0 %v1149
        %v1217 = vpop.f32.mrb[0].mxu0
        %v1218 = vadd.f32 0.0, %v1217
        %v1219 = vpop.f32.mrb[0].mxu0
        %1220 = vdwg.mxu0
        %v1221 = vmul.f32 %v999, %v925
        %v1222 = vmul.f32 %v1072, %v926
        %v1223 = vmul.f32 %v1145, %v927
        %v1224 = vmul.f32 %v1218, %v928
        %1226 = vrot.lane.b32.xlu0 %v1222, 8
        %v1227 = vpop.permute.xlu0 %1226
        %1230 = vrot.lane.b32.xlu0 %v1223, 16
        %v1231 = vpop.permute.xlu0 %1230
        %1234 = vrot.lane.b32.xlu0 %v1224, 24
        %v1235 = vpop.permute.xlu0 %1234
        %v1237 = vsel %vm592, %v1221, %v1227
        %vm1238 = vcmask 130048
        %v1239 = vsel %vm1238, %v1237, %v1231
        %vm1240 = vcmask 195584
        %v1241 = vsel %vm1240, %v1239, %v1235
        %v1242 = vld [vmem:[#allocation10] sm:$0xff]
        %v1243 = vld [vmem:[#allocation10 + $0x8] sm:$0xff]
        %v1244 = vld [vmem:[#allocation10 + $0x10] sm:$0xff]
        %v1245 = vld [vmem:[#allocation10 + $0x18] sm:$0xff]
        %v1246 = vlaneseq
        %v1247 = vshrl.u32 %v1246, 7
        %v1248 = vsub.s32 0, %v1247
        %v1249 = vrot.slane %v329, %v1248
        %v1251 = vsel %vm338, %v1241, 0
        %1253 = vmatprep.subr.mxu0 0.0
        %1254 = vmatpush1.msra.mxu0 %v1242
        %1255 = vmatprep.subr.mxu0 0.0
        %1256 = vmatpush1.msra.mxu0 %v1243
        %1257 = vmatprep.subr.mxu0 0.0
        %1258 = vmatpush1.msra.mxu0 %v1244
        %1259 = vmatprep.subr.mxu0 0.0
        %1260 = vmatpush1.msra.mxu0 %v1245
        %1261 = vmatprep.subr.mxu0 0.0
        %1262 = vmatpush1.msra.mxu0 0.0
        %1263 = vmatprep.subr.mxu0 0.0
        %1264 = vmatpush1.msra.mxu0 0.0
        %1265 = vmatprep.subr.mxu0 0.0
        %1266 = vmatpush1.msra.mxu0 0.0
        %1267 = vmatprep.subr.mxu0 0.0
        %1268 = vmatpush1.msra.mxu0 0.0
        %1269 = vmatprep.subr.mxu0 0.0
        %1270 = vmatpush1.msra.mxu0 0.0
        %1271 = vmatprep.subr.mxu0 0.0
        %1272 = vmatpush1.msra.mxu0 0.0
        %1273 = vmatprep.subr.mxu0 0.0
        %1274 = vmatpush1.msra.mxu0 0.0
        %1275 = vmatprep.subr.mxu0 0.0
        %1276 = vmatpush1.msra.mxu0 0.0
        %1277 = vmatprep.subr.mxu0 0.0
        %1278 = vmatpush1.msra.mxu0 0.0
        %1279 = vmatprep.subr.mxu0 0.0
        %1280 = vmatpush1.msra.mxu0 0.0
        %1281 = vmatprep.subr.mxu0 0.0
        %1282 = vmatpush1.msra.mxu0 0.0
        %1283 = vmatprep.subr.mxu0 0.0
        %1284 = vmatpush1.msra.mxu0 0.0
        %1285 = vmatprep.subr.mxu0 0.0
        %1286 = vmatpush1.msra.mxu0 0.0
        %1287 = vmatprep.subr.mxu0 0.0
        %1288 = vmatpush1.msra.mxu0 0.0
        %1289 = vmatprep.subr.mxu0 0.0
        %1290 = vmatpush1.msra.mxu0 0.0
        %1291 = vmatprep.subr.mxu0 0.0
        %1292 = vmatpush1.msra.mxu0 0.0
        %1293 = vmatprep.subr.mxu0 0.0
        %1294 = vmatpush1.msra.mxu0 0.0
        %1295 = vmatprep.subr.mxu0 0.0
        %1296 = vmatpush1.msra.mxu0 0.0
        %1297 = vmatprep.subr.mxu0 0.0
        %1298 = vmatpush1.msra.mxu0 0.0
        %1299 = vmatprep.subr.mxu0 0.0
        %1300 = vmatpush1.msra.mxu0 0.0
        %1301 = vmatprep.subr.mxu0 0.0
        %1302 = vmatpush1.msra.mxu0 0.0
        %1303 = vmatprep.subr.mxu0 0.0
        %1304 = vmatpush1.msra.mxu0 0.0
        %1305 = vmatprep.subr.mxu0 0.0
        %1306 = vmatpush1.msra.mxu0 0.0
        %1307 = vmatprep.subr.mxu0 0.0
        %1308 = vmatpush1.msra.mxu0 0.0
        %1309 = vmatprep.subr.mxu0 0.0
        %1310 = vmatpush1.msra.mxu0 0.0
        %1311 = vmatprep.subr.mxu0 0.0
        %1312 = vmatpush1.msra.mxu0 0.0
        %1313 = vmatprep.subr.mxu0 0.0
        %1314 = vmatpush1.msra.mxu0 0.0
        %1315 = vmatprep.subr.mxu0 0.0
        %1316 = vmatpush1.msra.mxu0 0.0
        %1317 = vmatprep.mubr.f32.mxu0 0.0
        %1318 = vmatmul.mubr.f32.gmra.mrb[0].mxu0 %v1251
        %v1319 = vpop.f32.mrb[0].mxu0
        %v1320 = vadd.f32 %v1249, %v1319
        %v1321 = vpop.f32.mrb[0].mxu0
        %1322 = vdwg.mxu0
        %1323 = vst.msk [vmem:[%s324] sm:$0xff] %vm338, %v1320
        %s1324 = sand.u32 %s164, 1
        %s1325 = scalar_lea.sflag [#allocation4], %s1324
        %s1326 = sand.u32 %s164, 1
        %s1327 = smul.addr %s1326, 8
        %s1328 = scalar_lea.vmem [#allocation11], %s1327
        // Predicated region
        $region65: #{tpu_custom_call.1} parent=43 // pred_check
          %p1329 = pneg %p174
        $region66: #{tpu_custom_call.1} parent=43 // pred_check_branch
          %1331 = sbr.rel (%p1329) target = $region68
        $region67: #{tpu_custom_call.1} parent=43 // pred_region
          %s1333 = ssub.s32 128, 128
          %1334 = vsyncadd %s1325, %s1333
          %s1335 = smul.addr %s25, 128
          %s1336 = scalar_lea.hbm %s6, %s1335
          %s1338 = sshll.u32 %s1328, 4
          %s1339 = int_to_ptr.vmem [resolvable:$true] %s1338
          %1341 = dma.vmem_to_hbm [thread:$0]  %s1339, 128, %s1336, %s1325
        $region68: #{tpu_custom_call.1} parent=43 // pred_fallthru
          _
      $region44: #{tpu_custom_call.1} parent=5 // pred_fallthru
        _
      %p1342 = scmp.le.s32.totalorder 2, %s20
      // Predicated region
      $region69: #{tpu_custom_call.1} parent=5 // pred_check
        %p1343 = pneg %p1342
      $region70: #{tpu_custom_call.1} parent=5 // pred_check_branch
        %1345 = sbr.rel (%p1343) target = $region72
      $region71: #{tpu_custom_call.1} parent=5 // pred_region
        %s1346 = ssub.s32 %s20, 2
        // Predicated region
        $region73: #{tpu_custom_call.1} parent=71 // pred_check
          %p1347 = pneg %p180
        $region74: #{tpu_custom_call.1} parent=71 // pred_check_branch
          %1349 = sbr.rel (%p1347) target = $region76
        $region75: #{tpu_custom_call.1} parent=71 // pred_region
          %s1350 = sand.u32 %s165, 1
          %s1351 = scalar_lea.sflag [#allocation4], %s1350
          %s1352 = sand.u32 %s165, 1
          %s1353 = smul.addr %s1352, 8
          %s1354 = scalar_lea.vmem [#allocation11], %s1353
          %1355 = dma.done %s1351, 128
        $region76: #{tpu_custom_call.1} parent=71 // pred_fallthru
          _
      $region72: #{tpu_custom_call.1} parent=5 // pred_fallthru
        _
    $region6: #{tpu_custom_call.1} parent=1 // loop_footer
      %s24 = sadd.s32 1, %s20
    $region7: #{tpu_custom_call.1} parent=1 // loop_footer_branch
      %19 = sbr.rel target = $region3
    $region8: #{tpu_custom_call.1} parent=1 // loop_exit
      _
    %1356 = vsyncpa [#allocation3], 1
    %s1357 = scalar_lea.sflag [#allocation3], 1
    %1358 = vsyncpa %s1357, 1
    %1359 = vsyncpa [#allocation6], 1
    %1360 = vsyncpa [#allocation9], 1
    %1361 = vsyncpa [#allocation4], 1
    %s1362 = scalar_lea.sflag [#allocation4], 1
    %1363 = vsyncpa %s1362, 1

</llo_original>
